<compile_context>
chip_gen: v5e
topology: v5e:2x2
jax: 0.10.0
libtpu: 0.0.40
codegen_flags: <defaults>
</compile_context>

<pallas_src>
import math
import numpy as np

import jax
import jax.numpy as jnp
from jax.experimental import pallas as pl
from jax.experimental.pallas import tpu as pltpu


def _round_up(x, m):
    return ((x + m - 1) // m) * m


# ----------------------------- in-kernel helpers -----------------------------

def _gelu(x):
    c = math.sqrt(2.0 / math.pi)
    return 0.5 * x * (1.0 + jnp.tanh(c * (x + 0.044715 * x * x * x)))


def _layernorm(y, gamma, beta, eps=1e-5):
    mu = jnp.mean(y, axis=-1, keepdims=True)
    var = jnp.mean(jnp.square(y - mu), axis=-1, keepdims=True)
    return (y - mu) * jax.lax.rsqrt(var + eps) * gamma + beta


# ------------------------------ parameter setup ------------------------------

def dextra_glt_config(in_proj, out_feat, width_mult, depth, max_groups):
    """(in_features, out_features, groups) per GLT layer of the DExTra pyramid,
    accounting for the group-wise input-mixer concatenations between layers."""
    mid = int(math.ceil(depth / 2.0))
    max_feat = int(in_proj * width_mult)
    groups = [min(2 ** (i + 1), max_groups) for i in range(mid)]
    if mid == 1:
        widths = [max_feat]
    else:
        widths = [int(round(in_proj + (max_feat - in_proj) * i / (mid - 1))) for i in range(mid)]
    if depth % 2 == 0:
        groups = groups + groups[::-1]
        widths = widths + widths[::-1]
    else:
        groups = groups + groups[::-1][1:]
        widths = widths + widths[::-1][1:]
    widths[-1] = out_feat
    ins = [in_proj] + [w + in_proj for w in widths[:-1]]   # mixer: x ++ prev_out (group-wise)
    return list(zip(ins, widths, groups))


def init_params(key, cfg):
    E = cfg['d_model']
    P = E // cfg['dextra_proj']
    F = E // cfg['enc_ffn_red']
    glt_cfg = dextra_glt_config(P, P, cfg['width_multiplier'],
                                cfg['dextra_depth'], cfg['max_glt_groups'])
    ks = iter(jax.random.split(key, 64))

    def dense(din, dout):
        w = jax.random.normal(next(ks), (din, dout), jnp.float32) / math.sqrt(din)
        b = jax.random.normal(next(ks), (dout,), jnp.float32) * 0.02
        return w, b

    p = {}
    # DExTra input projection (linear -> LN -> GELU)
    w, b = dense(E, P)
    p['dx_in_w'], p['dx_in_b'] = w, b.reshape(1, P)
    p['dx_in_g'] = jnp.ones((1, P), jnp.float32)
    p['dx_in_be'] = jnp.zeros((1, P), jnp.float32)

    # DExTra group-linear layers: fold group structure (block-diagonal), the
    # glt_shuffle permutation and the group-wise input-mixer split into dense weights.
    # TODO(synk): wx/wo split assumes each group's mixer chunk is ordered
    #             [projected-input chunk, previous-output chunk] (DeLighT concat order).
    glt = []
    for li, (din, dout, g) in enumerate(glt_cfg):
        din_g, dout_g = din // g, dout // g
        wg = np.asarray(jax.random.normal(next(ks), (g, din_g, dout_g), jnp.float32)) / math.sqrt(din_g)
        bg = np.asarray(jax.random.normal(next(ks), (g, dout_g), jnp.float32)) * 0.02

        # dense block-diagonal equivalent of the per-group matmul + bias
        w_bd = np.zeros((din, dout), np.float32)
        b_d = np.zeros((dout,), np.float32)
        for gi in range(g):
            w_bd[gi * din_g:(gi + 1) * din_g, gi * dout_g:(gi + 1) * dout_g] = wg[gi]
            b_d[gi * dout_g:(gi + 1) * dout_g] = bg[gi]

        # fold glt_shuffle (interleave features across groups) into the columns
        col_src = np.empty((dout,), np.int64)
        for gi in range(g):
            for j in range(dout_g):
                col_src[j * g + gi] = gi * dout_g + j
        w_sh = w_bd[:, col_src]
        b_sh = b_d[col_src]

        entry = dict(gamma=jnp.ones((1, dout), jnp.float32),
                     beta=jnp.zeros((1, dout), jnp.float32),
                     b=jnp.asarray(b_sh.reshape(1, dout)))
        if li == 0:
            entry['w'] = jnp.asarray(w_sh)                 # (P, dout)
        else:
            # group-wise concat(x0, prev_out) @ W  ==  x0 @ Wx + prev_out @ Wo
            dprev = glt_cfg[li - 1][1]
            px_g, po_g = P // g, dprev // g
            wx = np.zeros((P, dout), np.float32)
            wo = np.zeros((dprev, dout), np.float32)
            for gi in range(g):
                wx[gi * px_g:(gi + 1) * px_g, :] = w_sh[gi * din_g:gi * din_g + px_g, :]
                wo[gi * po_g:(gi + 1) * po_g, :] = w_sh[gi * din_g + px_g:(gi + 1) * din_g, :]
            entry['wx'] = jnp.asarray(wx)
            entry['wo'] = jnp.asarray(wo)
        glt.append(entry)
    p['glt'] = glt

    # single-head attention: fused QKV weight, 1/sqrt(P) scale folded into q
    qw, qb = dense(P, P)
    kw, kb = dense(P, P)
    vw, vb = dense(P, P)
    scale = float(P) ** -0.5
    p['qkv_w'] = jnp.concatenate([qw * scale, kw, vw], axis=1)            # (P, 3P)
    p['qkv_b'] = jnp.concatenate([qb * scale, kb, vb]).reshape(1, 3 * P)
    ow, ob = dense(P, E)
    p['o_w'], p['o_b'] = ow, ob.reshape(1, E)
    p['ln1_g'] = jnp.ones((1, E), jnp.float32)
    p['ln1_b'] = jnp.zeros((1, E), jnp.float32)

    # light-weight FFN
    w1, b1 = dense(E, F)
    p['fc1_w'], p['fc1_b'] = w1, b1.reshape(1, F)
    w2, b2 = dense(F, E)
    p['fc2_w'], p['fc2_b'] = w2, b2.reshape(1, E)
    p['ln2_g'] = jnp.ones((1, E), jnp.float32)
    p['ln2_b'] = jnp.zeros((1, E), jnp.float32)
    return p


def pack_params(p):
    """Pack all 2-D matmul weights into one column-blocked slab (each weight starts
    at a 128-aligned column, rows start at 0) and all (1,N) vectors into one
    (n_vec, 128k) slab.  Returns (wslab, vslab, wmeta, vmeta)."""
    wlist = [('dx_in', p['dx_in_w'])]
    for i, lp in enumerate(p['glt']):
        if i == 0:
            wlist.append(('glt0_w', lp['w']))
        else:
            wlist.append(('glt%d_wx' % i, lp['wx']))
            wlist.append(('glt%d_wo' % i, lp['wo']))
    wlist += [('qkv', p['qkv_w']), ('o', p['o_w']),
              ('fc1', p['fc1_w']), ('fc2', p['fc2_w'])]

    rmax = _round_up(max(int(w.shape[0]) for _, w in wlist), 8)
    wmeta, col = {}, 0
    for name, w in wlist:
        din, dout = int(w.shape[0]), int(w.shape[1])
        wmeta[name] = (din, dout, col)
        col += _round_up(dout, 128)
    wslab = np.zeros((rmax, max(col, 128)), np.float32)
    for name, w in wlist:
        din, dout, c0 = wmeta[name]
        wslab[:din, c0:c0 + dout] = np.asarray(w, np.float32)

    vlist = [('dx_in_b', p['dx_in_b']), ('dx_in_g', p['dx_in_g']), ('dx_in_be', p['dx_in_be'])]
    for i, lp in enumerate(p['glt']):
        vlist += [('glt%d_b' % i, lp['b']), ('glt%d_g' % i, lp['gamma']),
                  ('glt%d_be' % i, lp['beta'])]
    vlist += [('qkv_b', p['qkv_b']), ('o_b', p['o_b']),
              ('ln1_g', p['ln1_g']), ('ln1_b', p['ln1_b']),
              ('fc1_b', p['fc1_b']), ('fc2_b', p['fc2_b']),
              ('ln2_g', p['ln2_g']), ('ln2_b', p['ln2_b'])]
    vwidth = _round_up(max(int(np.asarray(v).size) for _, v in vlist), 128)
    vslab = np.zeros((_round_up(len(vlist), 8), vwidth), np.float32)
    vmeta = {}
    for r, (name, v) in enumerate(vlist):
        flat = np.asarray(v, np.float32).reshape(-1)
        vmeta[name] = (int(flat.size), r)
        vslab[r, :flat.size] = flat
    return jnp.asarray(wslab), jnp.asarray(vslab), wmeta, vmeta


# --------------------------------- forward -----------------------------------

def delitr_encoder_layer_forward(wslab, vslab, wmeta, vmeta,
                                 x, encoder_padding_mask, attn_mask, cfg):
    """x: (T, B, E); encoder_padding_mask: (B, T) with 1 = pad; attn_mask: (T, T) binary."""
    T, B, E = x.shape
    P = E // cfg['dextra_proj']
    M = B * T
    n_glt = 1 + sum(1 for k in wmeta if k.endswith('_wx'))
    mxu_bf16 = bool(cfg.get('mxu_bf16', False))

    # Flatten (B, T) -> M rows (grouped by batch element) for all token-parallel matmuls.
    xb = jnp.transpose(x, (1, 0, 2)).reshape(M, E).astype(jnp.float32)
    am = attn_mask.astype(jnp.float32)                 # (T, T), 1 = exclude key
    kp = encoder_padding_mask.astype(jnp.float32)      # (B, T), 1 = padded key

    def _mm(a, w):
        # Optional bf16 MXU operands (v6e/v7x); accumulation / epilogues stay f32.
        if mxu_bf16:
            a = a.astype(jnp.bfloat16)
            w = w.astype(jnp.bfloat16)
        return jnp.dot(a, w, preferred_element_type=jnp.float32)

    def kernel(x_ref, am_ref, kp_ref, w_ref, v_ref, o_ref, ctx_ref):
        # static-slice views into the packed parameter slabs (zero runtime cost)
        def W(name):
            din, dout, c0 = wmeta[name]
            return w_ref[0:din, c0:c0 + dout]

        def V(name):
            n, r = vmeta[name]
            return v_ref[r:r + 1, 0:n]

        X = x_ref[...]                                   # (M, E) all tokens of all sequences
        residual = X

        # ---- DExTra input projection: linear -> LN -> GELU ----
        h = _gelu(_layernorm(_mm(X, W('dx_in')) + V('dx_in_b'),
                             V('dx_in_g'), V('dx_in_be')))           # (M, P)

        # ---- DExTra GLT pyramid (group structure, shuffle, mixer folded into dense W) ----
        out = h
        for i in range(n_glt):
            if i == 0:
                y = _mm(h, W('glt0_w')) + V('glt0_b')
            else:
                y = (_mm(h, W('glt%d_wx' % i)) + _mm(out, W('glt%d_wo' % i))
                     + V('glt%d_b' % i))
            out = _gelu(_layernorm(y, V('glt%d_g' % i), V('glt%d_be' % i)))
        d = out                                          # (M, P)

        # ---- single-head self-attention (fused QKV, 1/sqrt(P) pre-folded into q) ----
        qkv = _mm(d, W('qkv')) + V('qkv_b')              # (M, 3P)
        # TODO(synk): at production P >= 128, place q/k/v on 128-lane boundaries to
        #             avoid intra-vreg lane shuffles from the slices below.

        # masks as additive biases, computed in-kernel (cheap VPU filler)
        attn_bias = am_ref[...] * jnp.float32(-1e8)      # (T, T)
        kp_bias = kp_ref[...] * jnp.float32(-1e9)        # (B, T), finite so no NaNs

        # per-sequence score/softmax/context (small static loop; B is tiny here).
        # TODO(synk): production T/B -> flash-style KV-tiled online softmax + grid over M.
        for b in range(B):
            r0 = b * T
            qb = qkv[r0:r0 + T, 0:P]
            kb = qkv[r0:r0 + T, P:2 * P]
            vb = qkv[r0:r0 + T, 2 * P:3 * P]
            s = jax.lax.dot_general(qb, kb, (((1,), (1,)), ((), ())),
                                    preferred_element_type=jnp.float32)   # (T, T)
            s = s + attn_bias + kp_bias[b:b + 1, :]
            mx = jnp.max(s, axis=-1, keepdims=True)
            e = jnp.exp(s - mx)
            pattn = e * pl.reciprocal(jnp.sum(e, axis=-1, keepdims=True), approx=True)
            ctx_ref[r0:r0 + T, :] = jnp.dot(pattn, vb,
                                            preferred_element_type=jnp.float32)
        ctx = ctx_ref[...]                               # (M, P)

        attn_out = _mm(ctx, W('o')) + V('o_b')           # (M, E)

        # residual + post-norm (normalize_before=False)
        x1 = _layernorm(attn_out + residual, V('ln1_g'), V('ln1_b'))

        # ---- light-weight FFN + residual + post-norm ----
        hf = _gelu(_mm(x1, W('fc1')) + V('fc1_b'))
        hf = _mm(hf, W('fc2')) + V('fc2_b')
        o_ref[...] = _layernorm(hf + x1, V('ln2_g'), V('ln2_b'))

    vmem_spec = lambda: pl.BlockSpec(memory_space=pltpu.MemorySpace.VMEM)
    y_flat = pl.pallas_call(
        kernel,
        out_shape=jax.ShapeDtypeStruct((M, E), jnp.float32),
        in_specs=[vmem_spec() for _ in range(5)],
        out_specs=vmem_spec(),
        scratch_shapes=[pltpu.VMEM((M, P), jnp.float32)],
        compiler_params=pltpu.CompilerParams(vmem_limit_bytes=32 * 1024 * 1024),
    )(xb, am, kp, wslab, vslab)

    return jnp.transpose(y_flat.reshape(B, T, E), (1, 0, 2))        # back to (T, B, E)


# ----------------------------------- main -------------------------------------

if __name__ == "__main__":
    T, B = 8, 2
    cfg = dict(d_model=64, width_multiplier=2.0, dextra_depth=4, dextra_dropout=0.1,
               dextra_proj=2, attn_dropout=0.1, dropout=0.1, act_dropout=0.1,
               ffn_dropout=0.1, enc_ffn_red=4, norm_type='ln', act_type='gelu',
               normalize_before=False,
               mxu_bf16=False)   # set True on v6e/v7x at production M for bf16 MXU operands
    cfg['max_glt_groups'] = 2 ** math.ceil(math.log(cfg['d_model'] // 32, 2)) \
        if cfg['d_model'] // 32 > 1 else 1

    key = jax.random.PRNGKey(0)
    kx, kparam = jax.random.split(key)
    x = jax.random.normal(kx, (T, B, cfg['d_model']), jnp.float32)

    # padding mask: batch 0 full length, batch 1 has 2 padded tokens
    lengths = jnp.array([T, T - 2])
    t_idx = jnp.arange(T)
    encoder_padding_mask = (t_idx[None, :] >= lengths[:, None]).astype(jnp.float32)  # (B, T)
    # binary attn_mask: exclude keys farther than 5 positions away
    attn_mask = (jnp.abs(t_idx[:, None] - t_idx[None, :]) > 5).astype(jnp.float32)   # (T, T)

    params = init_params(kparam, cfg)
    wslab, vslab, wmeta, vmeta = pack_params(params)

    y = delitr_encoder_layer_forward(wslab, vslab, wmeta, vmeta,
                                     x, encoder_padding_mask, attn_mask, cfg)
    y = jax.block_until_ready(y)

    assert y.shape == (T, B, cfg['d_model'])
    assert bool(jnp.all(jnp.isfinite(y)))
    print("KERNEL_OK")
</pallas_src>

<mosaic_0001>
module attributes {stable_mosaic.version = 11 : i64} {
  func.func @kernel(%arg0: memref<16x64xf32, #tpu.memory_space<vmem>>, %arg1: memref<8x8xf32, #tpu.memory_space<vmem>>, %arg2: memref<2x8xf32, #tpu.memory_space<vmem>>, %arg3: memref<64x1536xf32, #tpu.memory_space<vmem>>, %arg4: memref<24x128xf32, #tpu.memory_space<vmem>>, %arg5: memref<16x64xf32, #tpu.memory_space<vmem>>, %arg6: memref<16x32xf32, #tpu.memory_space<vmem>>) attributes {dimension_semantics = [], scalar_prefetch = 0 : i64, scratch_operands = 1 : i64, tpu.core_type = #tpu.core_type<tc>} {
    %c0 = arith.constant 0 : index
    %c0_0 = arith.constant 0 : index
    %0 = vector.load %arg0[%c0, %c0_0] : memref<16x64xf32, #tpu.memory_space<vmem>>, vector<16x64xf32>
    %c0_1 = arith.constant 0 : index
    %c0_2 = arith.constant 0 : index
    %1 = vector.load %arg3[%c0_1, %c0_2] : memref<64x1536xf32, #tpu.memory_space<vmem>>, vector<64x32xf32>
    %cst = arith.constant dense<0.000000e+00> : vector<16x32xf32>
    %2 = tpu.matmul %0, %1, %cst {dimension_numbers = #tpu.dot_dimension_numbers<[1], [0], [0], [1], [0, 0, 1, 1], [], []>} : vector<16x64xf32>, vector<64x32xf32>, vector<16x32xf32> -> vector<16x32xf32>
    %c0_3 = arith.constant 0 : index
    %c0_4 = arith.constant 0 : index
    %3 = vector.load %arg4[%c0_3, %c0_4] : memref<24x128xf32, #tpu.memory_space<vmem>>, vector<1x32xf32>
    %4 = vector.broadcast %3 : vector<1x32xf32> to vector<16x32xf32>
    %5 = arith.addf %2, %4 : vector<16x32xf32>
    %c1 = arith.constant 1 : index
    %c0_5 = arith.constant 0 : index
    %6 = vector.load %arg4[%c1, %c0_5] : memref<24x128xf32, #tpu.memory_space<vmem>>, vector<1x32xf32>
    %c2 = arith.constant 2 : index
    %c0_6 = arith.constant 0 : index
    %7 = vector.load %arg4[%c2, %c0_6] : memref<24x128xf32, #tpu.memory_space<vmem>>, vector<1x32xf32>
    %cst_7 = arith.constant dense<0.000000e+00> : vector<16xf32>
    %8 = vector.multi_reduction <add>, %5, %cst_7 [1] : vector<16x32xf32> to vector<16xf32>
    %9 = vector.shape_cast %8 : vector<16xf32> to vector<16x1xf32>
    %cst_8 = arith.constant 3.200000e+01 : f32
    %10 = vector.broadcast %cst_8 : f32 to vector<16x1xf32>
    %11 = arith.divf %9, %10 : vector<16x1xf32>
    %12 = vector.broadcast %11 : vector<16x1xf32> to vector<16x32xf32>
    %13 = arith.subf %5, %12 : vector<16x32xf32>
    %14 = arith.mulf %13, %13 : vector<16x32xf32>
    %cst_9 = arith.constant dense<0.000000e+00> : vector<16xf32>
    %15 = vector.multi_reduction <add>, %14, %cst_9 [1] : vector<16x32xf32> to vector<16xf32>
    %16 = vector.shape_cast %15 : vector<16xf32> to vector<16x1xf32>
    %cst_10 = arith.constant 3.200000e+01 : f32
    %17 = vector.broadcast %cst_10 : f32 to vector<16x1xf32>
    %18 = arith.divf %16, %17 : vector<16x1xf32>
    %19 = vector.broadcast %11 : vector<16x1xf32> to vector<16x32xf32>
    %20 = arith.subf %5, %19 : vector<16x32xf32>
    %cst_11 = arith.constant 9.99999974E-6 : f32
    %21 = vector.broadcast %cst_11 : f32 to vector<16x1xf32>
    %22 = arith.addf %18, %21 : vector<16x1xf32>
    %23 = math.rsqrt %22 : vector<16x1xf32>
    %24 = vector.broadcast %23 : vector<16x1xf32> to vector<16x32xf32>
    %25 = arith.mulf %20, %24 : vector<16x32xf32>
    %26 = vector.broadcast %6 : vector<1x32xf32> to vector<16x32xf32>
    %27 = arith.mulf %25, %26 : vector<16x32xf32>
    %28 = vector.broadcast %7 : vector<1x32xf32> to vector<16x32xf32>
    %29 = arith.addf %27, %28 : vector<16x32xf32>
    %cst_12 = arith.constant 5.000000e-01 : f32
    %30 = vector.broadcast %cst_12 : f32 to vector<16x32xf32>
    %31 = arith.mulf %30, %29 : vector<16x32xf32>
    %cst_13 = arith.constant 4.471500e-02 : f32
    %32 = vector.broadcast %cst_13 : f32 to vector<16x32xf32>
    %33 = arith.mulf %32, %29 : vector<16x32xf32>
    %34 = arith.mulf %33, %29 : vector<16x32xf32>
    %35 = arith.mulf %34, %29 : vector<16x32xf32>
    %36 = arith.addf %29, %35 : vector<16x32xf32>
    %cst_14 = arith.constant 0.797884583 : f32
    %37 = vector.broadcast %cst_14 : f32 to vector<16x32xf32>
    %38 = arith.mulf %37, %36 : vector<16x32xf32>
    %39 = math.tanh %38 : vector<16x32xf32>
    %cst_15 = arith.constant 1.000000e+00 : f32
    %40 = vector.broadcast %cst_15 : f32 to vector<16x32xf32>
    %41 = arith.addf %40, %39 : vector<16x32xf32>
    %42 = arith.mulf %31, %41 : vector<16x32xf32>
    %c0_16 = arith.constant 0 : index
    %c128 = arith.constant 128 : index
    %43 = vector.load %arg3[%c0_16, %c128] : memref<64x1536xf32, #tpu.memory_space<vmem>>, vector<32x32xf32>
    %cst_17 = arith.constant dense<0.000000e+00> : vector<16x32xf32>
    %44 = tpu.matmul %42, %43, %cst_17 {dimension_numbers = #tpu.dot_dimension_numbers<[1], [0], [0], [1], [0, 0, 1, 1], [], []>} : vector<16x32xf32>, vector<32x32xf32>, vector<16x32xf32> -> vector<16x32xf32>
    %c3 = arith.constant 3 : index
    %c0_18 = arith.constant 0 : index
    %45 = vector.load %arg4[%c3, %c0_18] : memref<24x128xf32, #tpu.memory_space<vmem>>, vector<1x32xf32>
    %46 = vector.broadcast %45 : vector<1x32xf32> to vector<16x32xf32>
    %47 = arith.addf %44, %46 : vector<16x32xf32>
    %c4 = arith.constant 4 : index
    %c0_19 = arith.constant 0 : index
    %48 = vector.load %arg4[%c4, %c0_19] : memref<24x128xf32, #tpu.memory_space<vmem>>, vector<1x32xf32>
    %c5 = arith.constant 5 : index
    %c0_20 = arith.constant 0 : index
    %49 = vector.load %arg4[%c5, %c0_20] : memref<24x128xf32, #tpu.memory_space<vmem>>, vector<1x32xf32>
    %cst_21 = arith.constant dense<0.000000e+00> : vector<16xf32>
    %50 = vector.multi_reduction <add>, %47, %cst_21 [1] : vector<16x32xf32> to vector<16xf32>
    %51 = vector.shape_cast %50 : vector<16xf32> to vector<16x1xf32>
    %cst_22 = arith.constant 3.200000e+01 : f32
    %52 = vector.broadcast %cst_22 : f32 to vector<16x1xf32>
    %53 = arith.divf %51, %52 : vector<16x1xf32>
    %54 = vector.broadcast %53 : vector<16x1xf32> to vector<16x32xf32>
    %55 = arith.subf %47, %54 : vector<16x32xf32>
    %56 = arith.mulf %55, %55 : vector<16x32xf32>
    %cst_23 = arith.constant dense<0.000000e+00> : vector<16xf32>
    %57 = vector.multi_reduction <add>, %56, %cst_23 [1] : vector<16x32xf32> to vector<16xf32>
    %58 = vector.shape_cast %57 : vector<16xf32> to vector<16x1xf32>
    %cst_24 = arith.constant 3.200000e+01 : f32
    %59 = vector.broadcast %cst_24 : f32 to vector<16x1xf32>
    %60 = arith.divf %58, %59 : vector<16x1xf32>
    %61 = vector.broadcast %53 : vector<16x1xf32> to vector<16x32xf32>
    %62 = arith.subf %47, %61 : vector<16x32xf32>
    %cst_25 = arith.constant 9.99999974E-6 : f32
    %63 = vector.broadcast %cst_25 : f32 to vector<16x1xf32>
    %64 = arith.addf %60, %63 : vector<16x1xf32>
    %65 = math.rsqrt %64 : vector<16x1xf32>
    %66 = vector.broadcast %65 : vector<16x1xf32> to vector<16x32xf32>
    %67 = arith.mulf %62, %66 : vector<16x32xf32>
    %68 = vector.broadcast %48 : vector<1x32xf32> to vector<16x32xf32>
    %69 = arith.mulf %67, %68 : vector<16x32xf32>
    %70 = vector.broadcast %49 : vector<1x32xf32> to vector<16x32xf32>
    %71 = arith.addf %69, %70 : vector<16x32xf32>
    %cst_26 = arith.constant 5.000000e-01 : f32
    %72 = vector.broadcast %cst_26 : f32 to vector<16x32xf32>
    %73 = arith.mulf %72, %71 : vector<16x32xf32>
    %cst_27 = arith.constant 4.471500e-02 : f32
    %74 = vector.broadcast %cst_27 : f32 to vector<16x32xf32>
    %75 = arith.mulf %74, %71 : vector<16x32xf32>
    %76 = arith.mulf %75, %71 : vector<16x32xf32>
    %77 = arith.mulf %76, %71 : vector<16x32xf32>
    %78 = arith.addf %71, %77 : vector<16x32xf32>
    %cst_28 = arith.constant 0.797884583 : f32
    %79 = vector.broadcast %cst_28 : f32 to vector<16x32xf32>
    %80 = arith.mulf %79, %78 : vector<16x32xf32>
    %81 = math.tanh %80 : vector<16x32xf32>
    %cst_29 = arith.constant 1.000000e+00 : f32
    %82 = vector.broadcast %cst_29 : f32 to vector<16x32xf32>
    %83 = arith.addf %82, %81 : vector<16x32xf32>
    %84 = arith.mulf %73, %83 : vector<16x32xf32>
    %c0_30 = arith.constant 0 : index
    %c256 = arith.constant 256 : index
    %85 = vector.load %arg3[%c0_30, %c256] : memref<64x1536xf32, #tpu.memory_space<vmem>>, vector<32x64xf32>
    %cst_31 = arith.constant dense<0.000000e+00> : vector<16x64xf32>
    %86 = tpu.matmul %42, %85, %cst_31 {dimension_numbers = #tpu.dot_dimension_numbers<[1], [0], [0], [1], [0, 0, 1, 1], [], []>} : vector<16x32xf32>, vector<32x64xf32>, vector<16x64xf32> -> vector<16x64xf32>
    %c0_32 = arith.constant 0 : index
    %c384 = arith.constant 384 : index
    %87 = vector.load %arg3[%c0_32, %c384] : memref<64x1536xf32, #tpu.memory_space<vmem>>, vector<32x64xf32>
    %cst_33 = arith.constant dense<0.000000e+00> : vector<16x64xf32>
    %88 = tpu.matmul %84, %87, %cst_33 {dimension_numbers = #tpu.dot_dimension_numbers<[1], [0], [0], [1], [0, 0, 1, 1], [], []>} : vector<16x32xf32>, vector<32x64xf32>, vector<16x64xf32> -> vector<16x64xf32>
    %89 = arith.addf %86, %88 : vector<16x64xf32>
    %c6 = arith.constant 6 : index
    %c0_34 = arith.constant 0 : index
    %90 = vector.load %arg4[%c6, %c0_34] : memref<24x128xf32, #tpu.memory_space<vmem>>, vector<1x64xf32>
    %91 = vector.broadcast %90 : vector<1x64xf32> to vector<16x64xf32>
    %92 = arith.addf %89, %91 : vector<16x64xf32>
    %c7 = arith.constant 7 : index
    %c0_35 = arith.constant 0 : index
    %93 = vector.load %arg4[%c7, %c0_35] : memref<24x128xf32, #tpu.memory_space<vmem>>, vector<1x64xf32>
    %c8 = arith.constant 8 : index
    %c0_36 = arith.constant 0 : index
    %94 = vector.load %arg4[%c8, %c0_36] : memref<24x128xf32, #tpu.memory_space<vmem>>, vector<1x64xf32>
    %cst_37 = arith.constant dense<0.000000e+00> : vector<16xf32>
    %95 = vector.multi_reduction <add>, %92, %cst_37 [1] : vector<16x64xf32> to vector<16xf32>
    %96 = vector.shape_cast %95 : vector<16xf32> to vector<16x1xf32>
    %cst_38 = arith.constant 6.400000e+01 : f32
    %97 = vector.broadcast %cst_38 : f32 to vector<16x1xf32>
    %98 = arith.divf %96, %97 : vector<16x1xf32>
    %99 = vector.broadcast %98 : vector<16x1xf32> to vector<16x64xf32>
    %100 = arith.subf %92, %99 : vector<16x64xf32>
    %101 = arith.mulf %100, %100 : vector<16x64xf32>
    %cst_39 = arith.constant dense<0.000000e+00> : vector<16xf32>
    %102 = vector.multi_reduction <add>, %101, %cst_39 [1] : vector<16x64xf32> to vector<16xf32>
    %103 = vector.shape_cast %102 : vector<16xf32> to vector<16x1xf32>
    %cst_40 = arith.constant 6.400000e+01 : f32
    %104 = vector.broadcast %cst_40 : f32 to vector<16x1xf32>
    %105 = arith.divf %103, %104 : vector<16x1xf32>
    %106 = vector.broadcast %98 : vector<16x1xf32> to vector<16x64xf32>
    %107 = arith.subf %92, %106 : vector<16x64xf32>
    %cst_41 = arith.constant 9.99999974E-6 : f32
    %108 = vector.broadcast %cst_41 : f32 to vector<16x1xf32>
    %109 = arith.addf %105, %108 : vector<16x1xf32>
    %110 = math.rsqrt %109 : vector<16x1xf32>
    %111 = vector.broadcast %110 : vector<16x1xf32> to vector<16x64xf32>
    %112 = arith.mulf %107, %111 : vector<16x64xf32>
    %113 = vector.broadcast %93 : vector<1x64xf32> to vector<16x64xf32>
    %114 = arith.mulf %112, %113 : vector<16x64xf32>
    %115 = vector.broadcast %94 : vector<1x64xf32> to vector<16x64xf32>
    %116 = arith.addf %114, %115 : vector<16x64xf32>
    %cst_42 = arith.constant 5.000000e-01 : f32
    %117 = vector.broadcast %cst_42 : f32 to vector<16x64xf32>
    %118 = arith.mulf %117, %116 : vector<16x64xf32>
    %cst_43 = arith.constant 4.471500e-02 : f32
    %119 = vector.broadcast %cst_43 : f32 to vector<16x64xf32>
    %120 = arith.mulf %119, %116 : vector<16x64xf32>
    %121 = arith.mulf %120, %116 : vector<16x64xf32>
    %122 = arith.mulf %121, %116 : vector<16x64xf32>
    %123 = arith.addf %116, %122 : vector<16x64xf32>
    %cst_44 = arith.constant 0.797884583 : f32
    %124 = vector.broadcast %cst_44 : f32 to vector<16x64xf32>
    %125 = arith.mulf %124, %123 : vector<16x64xf32>
    %126 = math.tanh %125 : vector<16x64xf32>
    %cst_45 = arith.constant 1.000000e+00 : f32
    %127 = vector.broadcast %cst_45 : f32 to vector<16x64xf32>
    %128 = arith.addf %127, %126 : vector<16x64xf32>
    %129 = arith.mulf %118, %128 : vector<16x64xf32>
    %c0_46 = arith.constant 0 : index
    %c512 = arith.constant 512 : index
    %130 = vector.load %arg3[%c0_46, %c512] : memref<64x1536xf32, #tpu.memory_space<vmem>>, vector<32x64xf32>
    %cst_47 = arith.constant dense<0.000000e+00> : vector<16x64xf32>
    %131 = tpu.matmul %42, %130, %cst_47 {dimension_numbers = #tpu.dot_dimension_numbers<[1], [0], [0], [1], [0, 0, 1, 1], [], []>} : vector<16x32xf32>, vector<32x64xf32>, vector<16x64xf32> -> vector<16x64xf32>
    %c0_48 = arith.constant 0 : index
    %c640 = arith.constant 640 : index
    %132 = vector.load %arg3[%c0_48, %c640] : memref<64x1536xf32, #tpu.memory_space<vmem>>, vector<64x64xf32>
    %cst_49 = arith.constant dense<0.000000e+00> : vector<16x64xf32>
    %133 = tpu.matmul %129, %132, %cst_49 {dimension_numbers = #tpu.dot_dimension_numbers<[1], [0], [0], [1], [0, 0, 1, 1], [], []>} : vector<16x64xf32>, vector<64x64xf32>, vector<16x64xf32> -> vector<16x64xf32>
    %134 = arith.addf %131, %133 : vector<16x64xf32>
    %c9 = arith.constant 9 : index
    %c0_50 = arith.constant 0 : index
    %135 = vector.load %arg4[%c9, %c0_50] : memref<24x128xf32, #tpu.memory_space<vmem>>, vector<1x64xf32>
    %136 = vector.broadcast %135 : vector<1x64xf32> to vector<16x64xf32>
    %137 = arith.addf %134, %136 : vector<16x64xf32>
    %c10 = arith.constant 10 : index
    %c0_51 = arith.constant 0 : index
    %138 = vector.load %arg4[%c10, %c0_51] : memref<24x128xf32, #tpu.memory_space<vmem>>, vector<1x64xf32>
    %c11 = arith.constant 11 : index
    %c0_52 = arith.constant 0 : index
    %139 = vector.load %arg4[%c11, %c0_52] : memref<24x128xf32, #tpu.memory_space<vmem>>, vector<1x64xf32>
    %cst_53 = arith.constant dense<0.000000e+00> : vector<16xf32>
    %140 = vector.multi_reduction <add>, %137, %cst_53 [1] : vector<16x64xf32> to vector<16xf32>
    %141 = vector.shape_cast %140 : vector<16xf32> to vector<16x1xf32>
    %cst_54 = arith.constant 6.400000e+01 : f32
    %142 = vector.broadcast %cst_54 : f32 to vector<16x1xf32>
    %143 = arith.divf %141, %142 : vector<16x1xf32>
    %144 = vector.broadcast %143 : vector<16x1xf32> to vector<16x64xf32>
    %145 = arith.subf %137, %144 : vector<16x64xf32>
    %146 = arith.mulf %145, %145 : vector<16x64xf32>
    %cst_55 = arith.constant dense<0.000000e+00> : vector<16xf32>
    %147 = vector.multi_reduction <add>, %146, %cst_55 [1] : vector<16x64xf32> to vector<16xf32>
    %148 = vector.shape_cast %147 : vector<16xf32> to vector<16x1xf32>
    %cst_56 = arith.constant 6.400000e+01 : f32
    %149 = vector.broadcast %cst_56 : f32 to vector<16x1xf32>
    %150 = arith.divf %148, %149 : vector<16x1xf32>
    %151 = vector.broadcast %143 : vector<16x1xf32> to vector<16x64xf32>
    %152 = arith.subf %137, %151 : vector<16x64xf32>
    %cst_57 = arith.constant 9.99999974E-6 : f32
    %153 = vector.broadcast %cst_57 : f32 to vector<16x1xf32>
    %154 = arith.addf %150, %153 : vector<16x1xf32>
    %155 = math.rsqrt %154 : vector<16x1xf32>
    %156 = vector.broadcast %155 : vector<16x1xf32> to vector<16x64xf32>
    %157 = arith.mulf %152, %156 : vector<16x64xf32>
    %158 = vector.broadcast %138 : vector<1x64xf32> to vector<16x64xf32>
    %159 = arith.mulf %157, %158 : vector<16x64xf32>
    %160 = vector.broadcast %139 : vector<1x64xf32> to vector<16x64xf32>
    %161 = arith.addf %159, %160 : vector<16x64xf32>
    %cst_58 = arith.constant 5.000000e-01 : f32
    %162 = vector.broadcast %cst_58 : f32 to vector<16x64xf32>
    %163 = arith.mulf %162, %161 : vector<16x64xf32>
    %cst_59 = arith.constant 4.471500e-02 : f32
    %164 = vector.broadcast %cst_59 : f32 to vector<16x64xf32>
    %165 = arith.mulf %164, %161 : vector<16x64xf32>
    %166 = arith.mulf %165, %161 : vector<16x64xf32>
    %167 = arith.mulf %166, %161 : vector<16x64xf32>
    %168 = arith.addf %161, %167 : vector<16x64xf32>
    %cst_60 = arith.constant 0.797884583 : f32
    %169 = vector.broadcast %cst_60 : f32 to vector<16x64xf32>
    %170 = arith.mulf %169, %168 : vector<16x64xf32>
    %171 = math.tanh %170 : vector<16x64xf32>
    %cst_61 = arith.constant 1.000000e+00 : f32
    %172 = vector.broadcast %cst_61 : f32 to vector<16x64xf32>
    %173 = arith.addf %172, %171 : vector<16x64xf32>
    %174 = arith.mulf %163, %173 : vector<16x64xf32>
    %c0_62 = arith.constant 0 : index
    %c768 = arith.constant 768 : index
    %175 = vector.load %arg3[%c0_62, %c768] : memref<64x1536xf32, #tpu.memory_space<vmem>>, vector<32x32xf32>
    %cst_63 = arith.constant dense<0.000000e+00> : vector<16x32xf32>
    %176 = tpu.matmul %42, %175, %cst_63 {dimension_numbers = #tpu.dot_dimension_numbers<[1], [0], [0], [1], [0, 0, 1, 1], [], []>} : vector<16x32xf32>, vector<32x32xf32>, vector<16x32xf32> -> vector<16x32xf32>
    %c0_64 = arith.constant 0 : index
    %c896 = arith.constant 896 : index
    %177 = vector.load %arg3[%c0_64, %c896] : memref<64x1536xf32, #tpu.memory_space<vmem>>, vector<64x32xf32>
    %cst_65 = arith.constant dense<0.000000e+00> : vector<16x32xf32>
    %178 = tpu.matmul %174, %177, %cst_65 {dimension_numbers = #tpu.dot_dimension_numbers<[1], [0], [0], [1], [0, 0, 1, 1], [], []>} : vector<16x64xf32>, vector<64x32xf32>, vector<16x32xf32> -> vector<16x32xf32>
    %179 = arith.addf %176, %178 : vector<16x32xf32>
    %c12 = arith.constant 12 : index
    %c0_66 = arith.constant 0 : index
    %180 = vector.load %arg4[%c12, %c0_66] : memref<24x128xf32, #tpu.memory_space<vmem>>, vector<1x32xf32>
    %181 = vector.broadcast %180 : vector<1x32xf32> to vector<16x32xf32>
    %182 = arith.addf %179, %181 : vector<16x32xf32>
    %c13 = arith.constant 13 : index
    %c0_67 = arith.constant 0 : index
    %183 = vector.load %arg4[%c13, %c0_67] : memref<24x128xf32, #tpu.memory_space<vmem>>, vector<1x32xf32>
    %c14 = arith.constant 14 : index
    %c0_68 = arith.constant 0 : index
    %184 = vector.load %arg4[%c14, %c0_68] : memref<24x128xf32, #tpu.memory_space<vmem>>, vector<1x32xf32>
    %cst_69 = arith.constant dense<0.000000e+00> : vector<16xf32>
    %185 = vector.multi_reduction <add>, %182, %cst_69 [1] : vector<16x32xf32> to vector<16xf32>
    %186 = vector.shape_cast %185 : vector<16xf32> to vector<16x1xf32>
    %cst_70 = arith.constant 3.200000e+01 : f32
    %187 = vector.broadcast %cst_70 : f32 to vector<16x1xf32>
    %188 = arith.divf %186, %187 : vector<16x1xf32>
    %189 = vector.broadcast %188 : vector<16x1xf32> to vector<16x32xf32>
    %190 = arith.subf %182, %189 : vector<16x32xf32>
    %191 = arith.mulf %190, %190 : vector<16x32xf32>
    %cst_71 = arith.constant dense<0.000000e+00> : vector<16xf32>
    %192 = vector.multi_reduction <add>, %191, %cst_71 [1] : vector<16x32xf32> to vector<16xf32>
    %193 = vector.shape_cast %192 : vector<16xf32> to vector<16x1xf32>
    %cst_72 = arith.constant 3.200000e+01 : f32
    %194 = vector.broadcast %cst_72 : f32 to vector<16x1xf32>
    %195 = arith.divf %193, %194 : vector<16x1xf32>
    %196 = vector.broadcast %188 : vector<16x1xf32> to vector<16x32xf32>
    %197 = arith.subf %182, %196 : vector<16x32xf32>
    %cst_73 = arith.constant 9.99999974E-6 : f32
    %198 = vector.broadcast %cst_73 : f32 to vector<16x1xf32>
    %199 = arith.addf %195, %198 : vector<16x1xf32>
    %200 = math.rsqrt %199 : vector<16x1xf32>
    %201 = vector.broadcast %200 : vector<16x1xf32> to vector<16x32xf32>
    %202 = arith.mulf %197, %201 : vector<16x32xf32>
    %203 = vector.broadcast %183 : vector<1x32xf32> to vector<16x32xf32>
    %204 = arith.mulf %202, %203 : vector<16x32xf32>
    %205 = vector.broadcast %184 : vector<1x32xf32> to vector<16x32xf32>
    %206 = arith.addf %204, %205 : vector<16x32xf32>
    %cst_74 = arith.constant 5.000000e-01 : f32
    %207 = vector.broadcast %cst_74 : f32 to vector<16x32xf32>
    %208 = arith.mulf %207, %206 : vector<16x32xf32>
    %cst_75 = arith.constant 4.471500e-02 : f32
    %209 = vector.broadcast %cst_75 : f32 to vector<16x32xf32>
    %210 = arith.mulf %209, %206 : vector<16x32xf32>
    %211 = arith.mulf %210, %206 : vector<16x32xf32>
    %212 = arith.mulf %211, %206 : vector<16x32xf32>
    %213 = arith.addf %206, %212 : vector<16x32xf32>
    %cst_76 = arith.constant 0.797884583 : f32
    %214 = vector.broadcast %cst_76 : f32 to vector<16x32xf32>
    %215 = arith.mulf %214, %213 : vector<16x32xf32>
    %216 = math.tanh %215 : vector<16x32xf32>
    %cst_77 = arith.constant 1.000000e+00 : f32
    %217 = vector.broadcast %cst_77 : f32 to vector<16x32xf32>
    %218 = arith.addf %217, %216 : vector<16x32xf32>
    %219 = arith.mulf %208, %218 : vector<16x32xf32>
    %c0_78 = arith.constant 0 : index
    %c1024 = arith.constant 1024 : index
    %220 = vector.load %arg3[%c0_78, %c1024] : memref<64x1536xf32, #tpu.memory_space<vmem>>, vector<32x96xf32>
    %cst_79 = arith.constant dense<0.000000e+00> : vector<16x96xf32>
    %221 = tpu.matmul %219, %220, %cst_79 {dimension_numbers = #tpu.dot_dimension_numbers<[1], [0], [0], [1], [0, 0, 1, 1], [], []>} : vector<16x32xf32>, vector<32x96xf32>, vector<16x96xf32> -> vector<16x96xf32>
    %c15 = arith.constant 15 : index
    %c0_80 = arith.constant 0 : index
    %222 = vector.load %arg4[%c15, %c0_80] : memref<24x128xf32, #tpu.memory_space<vmem>>, vector<1x96xf32>
    %223 = vector.broadcast %222 : vector<1x96xf32> to vector<16x96xf32>
    %224 = arith.addf %221, %223 : vector<16x96xf32>
    %c0_81 = arith.constant 0 : index
    %c0_82 = arith.constant 0 : index
    %225 = vector.load %arg1[%c0_81, %c0_82] : memref<8x8xf32, #tpu.memory_space<vmem>>, vector<8x8xf32>
    %cst_83 = arith.constant -1.000000e+08 : f32
    %226 = vector.broadcast %cst_83 : f32 to vector<8x8xf32>
    %227 = arith.mulf %225, %226 : vector<8x8xf32>
    %c0_84 = arith.constant 0 : index
    %c0_85 = arith.constant 0 : index
    %228 = vector.load %arg2[%c0_84, %c0_85] : memref<2x8xf32, #tpu.memory_space<vmem>>, vector<2x8xf32>
    %cst_86 = arith.constant -1.000000e+09 : f32
    %229 = vector.broadcast %cst_86 : f32 to vector<2x8xf32>
    %230 = arith.mulf %228, %229 : vector<2x8xf32>
    %231 = vector.extract_strided_slice %224 {offsets = [0, 0], sizes = [8, 32], strides = [1, 1]} : vector<16x96xf32> to vector<8x32xf32>
    %232 = vector.extract_strided_slice %224 {offsets = [0, 32], sizes = [8, 32], strides = [1, 1]} : vector<16x96xf32> to vector<8x32xf32>
    %233 = vector.extract_strided_slice %224 {offsets = [0, 64], sizes = [8, 32], strides = [1, 1]} : vector<16x96xf32> to vector<8x32xf32>
    %cst_87 = arith.constant dense<0.000000e+00> : vector<8x8xf32>
    %234 = tpu.matmul %231, %232, %cst_87 {dimension_numbers = #tpu.dot_dimension_numbers<[1], [1], [0], [0], [0, 0, 1, 0], [], []>} : vector<8x32xf32>, vector<8x32xf32>, vector<8x8xf32> -> vector<8x8xf32>
    %235 = arith.addf %234, %227 : vector<8x8xf32>
    %236 = vector.extract_strided_slice %230 {offsets = [0, 0], sizes = [1, 8], strides = [1, 1]} : vector<2x8xf32> to vector<1x8xf32>
    %237 = vector.broadcast %236 : vector<1x8xf32> to vector<8x8xf32>
    %238 = arith.addf %235, %237 : vector<8x8xf32>
    %cst_88 = arith.constant dense<0xFF800000> : vector<8xf32>
    %239 = vector.multi_reduction <maximumf>, %238, %cst_88 [1] : vector<8x8xf32> to vector<8xf32>
    %240 = vector.shape_cast %239 : vector<8xf32> to vector<8x1xf32>
    %241 = vector.broadcast %240 : vector<8x1xf32> to vector<8x8xf32>
    %242 = arith.subf %238, %241 : vector<8x8xf32>
    %243 = math.exp %242 : vector<8x8xf32>
    %cst_89 = arith.constant dense<0.000000e+00> : vector<8xf32>
    %244 = vector.multi_reduction <add>, %243, %cst_89 [1] : vector<8x8xf32> to vector<8xf32>
    %245 = vector.shape_cast %244 : vector<8xf32> to vector<8x1xf32>
    %246 = tpu.reciprocal %245 {approx = true} : vector<8x1xf32> -> vector<8x1xf32>
    %247 = vector.broadcast %246 : vector<8x1xf32> to vector<8x8xf32>
    %248 = arith.mulf %243, %247 : vector<8x8xf32>
    %cst_90 = arith.constant dense<0.000000e+00> : vector<8x32xf32>
    %249 = tpu.matmul %248, %233, %cst_90 {dimension_numbers = #tpu.dot_dimension_numbers<[1], [0], [0], [1], [0, 0, 1, 1], [], []>} : vector<8x8xf32>, vector<8x32xf32>, vector<8x32xf32> -> vector<8x32xf32>
    %c0_91 = arith.constant 0 : index
    %c0_92 = arith.constant 0 : index
    %250 = vector.load %arg6[%c0_91, %c0_92] : memref<16x32xf32, #tpu.memory_space<vmem>>, vector<8x32xf32>
    tpu.vector_store %arg6[%c0_91, %c0_92], %249 {strides = array<i32>} : memref<16x32xf32, #tpu.memory_space<vmem>>, vector<8x32xf32>,
    %251 = vector.extract_strided_slice %224 {offsets = [8, 0], sizes = [8, 32], strides = [1, 1]} : vector<16x96xf32> to vector<8x32xf32>
    %252 = vector.extract_strided_slice %224 {offsets = [8, 32], sizes = [8, 32], strides = [1, 1]} : vector<16x96xf32> to vector<8x32xf32>
    %253 = vector.extract_strided_slice %224 {offsets = [8, 64], sizes = [8, 32], strides = [1, 1]} : vector<16x96xf32> to vector<8x32xf32>
    %cst_93 = arith.constant dense<0.000000e+00> : vector<8x8xf32>
    %254 = tpu.matmul %251, %252, %cst_93 {dimension_numbers = #tpu.dot_dimension_numbers<[1], [1], [0], [0], [0, 0, 1, 0], [], []>} : vector<8x32xf32>, vector<8x32xf32>, vector<8x8xf32> -> vector<8x8xf32>
    %255 = arith.addf %254, %227 : vector<8x8xf32>
    %256 = vector.extract_strided_slice %230 {offsets = [1, 0], sizes = [1, 8], strides = [1, 1]} : vector<2x8xf32> to vector<1x8xf32>
    %257 = vector.broadcast %256 : vector<1x8xf32> to vector<8x8xf32>
    %258 = arith.addf %255, %257 : vector<8x8xf32>
    %cst_94 = arith.constant dense<0xFF800000> : vector<8xf32>
    %259 = vector.multi_reduction <maximumf>, %258, %cst_94 [1] : vector<8x8xf32> to vector<8xf32>
    %260 = vector.shape_cast %259 : vector<8xf32> to vector<8x1xf32>
    %261 = vector.broadcast %260 : vector<8x1xf32> to vector<8x8xf32>
    %262 = arith.subf %258, %261 : vector<8x8xf32>
    %263 = math.exp %262 : vector<8x8xf32>
    %cst_95 = arith.constant dense<0.000000e+00> : vector<8xf32>
    %264 = vector.multi_reduction <add>, %263, %cst_95 [1] : vector<8x8xf32> to vector<8xf32>
    %265 = vector.shape_cast %264 : vector<8xf32> to vector<8x1xf32>
    %266 = tpu.reciprocal %265 {approx = true} : vector<8x1xf32> -> vector<8x1xf32>
    %267 = vector.broadcast %266 : vector<8x1xf32> to vector<8x8xf32>
    %268 = arith.mulf %263, %267 : vector<8x8xf32>
    %cst_96 = arith.constant dense<0.000000e+00> : vector<8x32xf32>
    %269 = tpu.matmul %268, %253, %cst_96 {dimension_numbers = #tpu.dot_dimension_numbers<[1], [0], [0], [1], [0, 0, 1, 1], [], []>} : vector<8x8xf32>, vector<8x32xf32>, vector<8x32xf32> -> vector<8x32xf32>
    %c8_97 = arith.constant 8 : index
    %c0_98 = arith.constant 0 : index
    %270 = vector.load %arg6[%c8_97, %c0_98] : memref<16x32xf32, #tpu.memory_space<vmem>>, vector<8x32xf32>
    tpu.vector_store %arg6[%c8_97, %c0_98], %269 {strides = array<i32>} : memref<16x32xf32, #tpu.memory_space<vmem>>, vector<8x32xf32>,
    %c0_99 = arith.constant 0 : index
    %c0_100 = arith.constant 0 : index
    %271 = vector.load %arg6[%c0_99, %c0_100] : memref<16x32xf32, #tpu.memory_space<vmem>>, vector<16x32xf32>
    %c0_101 = arith.constant 0 : index
    %c1152 = arith.constant 1152 : index
    %272 = vector.load %arg3[%c0_101, %c1152] : memref<64x1536xf32, #tpu.memory_space<vmem>>, vector<32x64xf32>
    %cst_102 = arith.constant dense<0.000000e+00> : vector<16x64xf32>
    %273 = tpu.matmul %271, %272, %cst_102 {dimension_numbers = #tpu.dot_dimension_numbers<[1], [0], [0], [1], [0, 0, 1, 1], [], []>} : vector<16x32xf32>, vector<32x64xf32>, vector<16x64xf32> -> vector<16x64xf32>
    %c16 = arith.constant 16 : index
    %c0_103 = arith.constant 0 : index
    %274 = vector.load %arg4[%c16, %c0_103] : memref<24x128xf32, #tpu.memory_space<vmem>>, vector<1x64xf32>
    %275 = vector.broadcast %274 : vector<1x64xf32> to vector<16x64xf32>
    %276 = arith.addf %273, %275 : vector<16x64xf32>
    %277 = arith.addf %276, %0 : vector<16x64xf32>
    %c17 = arith.constant 17 : index
    %c0_104 = arith.constant 0 : index
    %278 = vector.load %arg4[%c17, %c0_104] : memref<24x128xf32, #tpu.memory_space<vmem>>, vector<1x64xf32>
    %c18 = arith.constant 18 : index
    %c0_105 = arith.constant 0 : index
    %279 = vector.load %arg4[%c18, %c0_105] : memref<24x128xf32, #tpu.memory_space<vmem>>, vector<1x64xf32>
    %cst_106 = arith.constant dense<0.000000e+00> : vector<16xf32>
    %280 = vector.multi_reduction <add>, %277, %cst_106 [1] : vector<16x64xf32> to vector<16xf32>
    %281 = vector.shape_cast %280 : vector<16xf32> to vector<16x1xf32>
    %cst_107 = arith.constant 6.400000e+01 : f32
    %282 = vector.broadcast %cst_107 : f32 to vector<16x1xf32>
    %283 = arith.divf %281, %282 : vector<16x1xf32>
    %284 = vector.broadcast %283 : vector<16x1xf32> to vector<16x64xf32>
    %285 = arith.subf %277, %284 : vector<16x64xf32>
    %286 = arith.mulf %285, %285 : vector<16x64xf32>
    %cst_108 = arith.constant dense<0.000000e+00> : vector<16xf32>
    %287 = vector.multi_reduction <add>, %286, %cst_108 [1] : vector<16x64xf32> to vector<16xf32>
    %288 = vector.shape_cast %287 : vector<16xf32> to vector<16x1xf32>
    %cst_109 = arith.constant 6.400000e+01 : f32
    %289 = vector.broadcast %cst_109 : f32 to vector<16x1xf32>
    %290 = arith.divf %288, %289 : vector<16x1xf32>
    %291 = vector.broadcast %283 : vector<16x1xf32> to vector<16x64xf32>
    %292 = arith.subf %277, %291 : vector<16x64xf32>
    %cst_110 = arith.constant 9.99999974E-6 : f32
    %293 = vector.broadcast %cst_110 : f32 to vector<16x1xf32>
    %294 = arith.addf %290, %293 : vector<16x1xf32>
    %295 = math.rsqrt %294 : vector<16x1xf32>
    %296 = vector.broadcast %295 : vector<16x1xf32> to vector<16x64xf32>
    %297 = arith.mulf %292, %296 : vector<16x64xf32>
    %298 = vector.broadcast %278 : vector<1x64xf32> to vector<16x64xf32>
    %299 = arith.mulf %297, %298 : vector<16x64xf32>
    %300 = vector.broadcast %279 : vector<1x64xf32> to vector<16x64xf32>
    %301 = arith.addf %299, %300 : vector<16x64xf32>
    %c0_111 = arith.constant 0 : index
    %c1280 = arith.constant 1280 : index
    %302 = vector.load %arg3[%c0_111, %c1280] : memref<64x1536xf32, #tpu.memory_space<vmem>>, vector<64x16xf32>
    %cst_112 = arith.constant dense<0.000000e+00> : vector<16x16xf32>
    %303 = tpu.matmul %301, %302, %cst_112 {dimension_numbers = #tpu.dot_dimension_numbers<[1], [0], [0], [1], [0, 0, 1, 1], [], []>} : vector<16x64xf32>, vector<64x16xf32>, vector<16x16xf32> -> vector<16x16xf32>
    %c19 = arith.constant 19 : index
    %c0_113 = arith.constant 0 : index
    %304 = vector.load %arg4[%c19, %c0_113] : memref<24x128xf32, #tpu.memory_space<vmem>>, vector<1x16xf32>
    %305 = vector.broadcast %304 : vector<1x16xf32> to vector<16x16xf32>
    %306 = arith.addf %303, %305 : vector<16x16xf32>
    %cst_114 = arith.constant 5.000000e-01 : f32
    %307 = vector.broadcast %cst_114 : f32 to vector<16x16xf32>
    %308 = arith.mulf %307, %306 : vector<16x16xf32>
    %cst_115 = arith.constant 4.471500e-02 : f32
    %309 = vector.broadcast %cst_115 : f32 to vector<16x16xf32>
    %310 = arith.mulf %309, %306 : vector<16x16xf32>
    %311 = arith.mulf %310, %306 : vector<16x16xf32>
    %312 = arith.mulf %311, %306 : vector<16x16xf32>
    %313 = arith.addf %306, %312 : vector<16x16xf32>
    %cst_116 = arith.constant 0.797884583 : f32
    %314 = vector.broadcast %cst_116 : f32 to vector<16x16xf32>
    %315 = arith.mulf %314, %313 : vector<16x16xf32>
    %316 = math.tanh %315 : vector<16x16xf32>
    %cst_117 = arith.constant 1.000000e+00 : f32
    %317 = vector.broadcast %cst_117 : f32 to vector<16x16xf32>
    %318 = arith.addf %317, %316 : vector<16x16xf32>
    %319 = arith.mulf %308, %318 : vector<16x16xf32>
    %c0_118 = arith.constant 0 : index
    %c1408 = arith.constant 1408 : index
    %320 = vector.load %arg3[%c0_118, %c1408] : memref<64x1536xf32, #tpu.memory_space<vmem>>, vector<16x64xf32>
    %cst_119 = arith.constant dense<0.000000e+00> : vector<16x64xf32>
    %321 = tpu.matmul %319, %320, %cst_119 {dimension_numbers = #tpu.dot_dimension_numbers<[1], [0], [0], [1], [0, 0, 1, 1], [], []>} : vector<16x16xf32>, vector<16x64xf32>, vector<16x64xf32> -> vector<16x64xf32>
    %c20 = arith.constant 20 : index
    %c0_120 = arith.constant 0 : index
    %322 = vector.load %arg4[%c20, %c0_120] : memref<24x128xf32, #tpu.memory_space<vmem>>, vector<1x64xf32>
    %323 = vector.broadcast %322 : vector<1x64xf32> to vector<16x64xf32>
    %324 = arith.addf %321, %323 : vector<16x64xf32>
    %325 = arith.addf %324, %301 : vector<16x64xf32>
    %c21 = arith.constant 21 : index
    %c0_121 = arith.constant 0 : index
    %326 = vector.load %arg4[%c21, %c0_121] : memref<24x128xf32, #tpu.memory_space<vmem>>, vector<1x64xf32>
    %c22 = arith.constant 22 : index
    %c0_122 = arith.constant 0 : index
    %327 = vector.load %arg4[%c22, %c0_122] : memref<24x128xf32, #tpu.memory_space<vmem>>, vector<1x64xf32>
    %cst_123 = arith.constant dense<0.000000e+00> : vector<16xf32>
    %328 = vector.multi_reduction <add>, %325, %cst_123 [1] : vector<16x64xf32> to vector<16xf32>
    %329 = vector.shape_cast %328 : vector<16xf32> to vector<16x1xf32>
    %cst_124 = arith.constant 6.400000e+01 : f32
    %330 = vector.broadcast %cst_124 : f32 to vector<16x1xf32>
    %331 = arith.divf %329, %330 : vector<16x1xf32>
    %332 = vector.broadcast %331 : vector<16x1xf32> to vector<16x64xf32>
    %333 = arith.subf %325, %332 : vector<16x64xf32>
    %334 = arith.mulf %333, %333 : vector<16x64xf32>
    %cst_125 = arith.constant dense<0.000000e+00> : vector<16xf32>
    %335 = vector.multi_reduction <add>, %334, %cst_125 [1] : vector<16x64xf32> to vector<16xf32>
    %336 = vector.shape_cast %335 : vector<16xf32> to vector<16x1xf32>
    %cst_126 = arith.constant 6.400000e+01 : f32
    %337 = vector.broadcast %cst_126 : f32 to vector<16x1xf32>
    %338 = arith.divf %336, %337 : vector<16x1xf32>
    %339 = vector.broadcast %331 : vector<16x1xf32> to vector<16x64xf32>
    %340 = arith.subf %325, %339 : vector<16x64xf32>
    %cst_127 = arith.constant 9.99999974E-6 : f32
    %341 = vector.broadcast %cst_127 : f32 to vector<16x1xf32>
    %342 = arith.addf %338, %341 : vector<16x1xf32>
    %343 = math.rsqrt %342 : vector<16x1xf32>
    %344 = vector.broadcast %343 : vector<16x1xf32> to vector<16x64xf32>
    %345 = arith.mulf %340, %344 : vector<16x64xf32>
    %346 = vector.broadcast %326 : vector<1x64xf32> to vector<16x64xf32>
    %347 = arith.mulf %345, %346 : vector<16x64xf32>
    %348 = vector.broadcast %327 : vector<1x64xf32> to vector<16x64xf32>
    %349 = arith.addf %347, %348 : vector<16x64xf32>
    %c0_128 = arith.constant 0 : index
    %c0_129 = arith.constant 0 : index
    %350 = vector.load %arg5[%c0_128, %c0_129] : memref<16x64xf32, #tpu.memory_space<vmem>>, vector<16x64xf32>
    tpu.vector_store %arg5[%c0_128, %c0_129], %349 {strides = array<i32>} : memref<16x64xf32, #tpu.memory_space<vmem>>, vector<16x64xf32>,
    return
  }
}

</mosaic_0001>

<llo_original>
// kernel: tpu_custom_call.1
$region0: #{tpu_custom_call.1}
  #allocation0 [shape = 'u32[]', space=smem, size = 0x4, offset = 0x4, fixed_abs, tag = 'smem constant byte address 0x4 - core index']
  #allocation1 [shape = 'u32[72,128]{1,0:T(1,128)}', space=vmem, size = 0x9000, scoped, tag = 'internal scratch']
  #allocation2 [shape = 'f32[16,32]{1,0:T(8,128)}', space=vmem, size = 0x2000, scoped, tag = 'scratch operand']
  %s0 = inlined_call_operand.hbm [shape: f32[16,64], index: 0, kind: input, shape index: {}]
  %s1 = inlined_call_operand.hbm [shape: f32[8,8], index: 1, kind: input, shape index: {}]
  %s2 = inlined_call_operand.hbm [shape: f32[2,8], index: 2, kind: input, shape index: {}]
  %s3 = inlined_call_operand.hbm [shape: f32[64,1536], index: 3, kind: input, shape index: {}]
  %s4 = inlined_call_operand.hbm [shape: f32[24,128], index: 4, kind: input, shape index: {}]
  %s5 = inlined_call_operand.hbm [shape: f32[16,64], index: 5, kind: output, shape index: {}]
  %s6 = sld [smem:[#allocation0]]
  $region50: #{tpu_custom_call.1} parent=0
    _
  %s8 = ssub.s32 1, %s6
  %s9 = scalar_select 0, %s8, %s6
  $region1: #{tpu_custom_call.1} parent=0
    #allocation3 [shape = 'u8[8192]{0}', space=vmem, size = 0x2000, scoped, tag = 'input window, operand 0, single buffered']
    #allocation4 [shape = 's32[1]{0}', space=sflag, size = 0x4, scoped, tag = 'scoped memory for tpu_custom_call.1']
    #allocation5 [shape = 's32[1]{0}', space=sflag, size = 0x4, scoped, tag = 'scoped memory for tpu_custom_call.1']
    #allocation6 [shape = 'u8[4096]{0}', space=vmem, size = 0x1000, scoped, tag = 'input window, operand 1, single buffered']
    #allocation7 [shape = 's32[1]{0}', space=sflag, size = 0x4, scoped, tag = 'scoped memory for tpu_custom_call.1']
    #allocation8 [shape = 'u8[1024]{0}', space=vmem, size = 0x400, scoped, tag = 'input window, operand 2, single buffered']
    #allocation9 [shape = 'u8[393216]{0}', space=vmem, size = 0x60000, scoped, tag = 'input window, operand 3, single buffered']
    #allocation10 [shape = 's32[1]{0}', space=sflag, size = 0x4, scoped, tag = 'scoped memory for tpu_custom_call.1']
    #allocation11 [shape = 'u8[12288]{0}', space=vmem, size = 0x3000, scoped, tag = 'input window, operand 4, single buffered']
    #allocation12 [shape = 'u8[8192]{0}', space=vmem, size = 0x2000, scoped, tag = 'output window, operand 0, single buffered']
    %10 = vsyncpa [#allocation4], 0
    %11 = vsyncpa [#allocation7], 0
    %12 = vsyncpa [#allocation10], 0
    %13 = vsyncpa [#allocation5], 0
    // Predicated region
    $region2: #{tpu_custom_call.1} parent=1 // pred_check
      _
    $region3: #{tpu_custom_call.1} parent=1 // pred_check_branch
      %15 = sbr.rel (0) target = $region5
    $region4: #{tpu_custom_call.1} parent=1 // pred_region
      %17 = vsyncadd [#allocation4], 0
      %s18 = sshll.u32 %s0, 4
      %s19 = int_to_ptr.hbm [resolvable:$true] %s18
      %s20 = sshll.u32 [#allocation3], 4
      %s21 = int_to_ptr.vmem [resolvable:$true] %s20
      %26 = dma.hbm_to_vmem [thread:$0]  %s19, 256, %s21, [#allocation4], 128, 128, 8
    $region5: #{tpu_custom_call.1} parent=1 // pred_fallthru
      _
    // Predicated region
    $region6: #{tpu_custom_call.1} parent=1 // pred_check
      _
    $region7: #{tpu_custom_call.1} parent=1 // pred_check_branch
      %28 = sbr.rel (0) target = $region9
    $region8: #{tpu_custom_call.1} parent=1 // pred_region
      %30 = vsyncadd [#allocation7], 0
      %s32 = sshll.u32 %s1, 4
      %s33 = int_to_ptr.hbm [resolvable:$true] %s32
      %s34 = sshll.u32 [#allocation6], 4
      %s35 = int_to_ptr.vmem [resolvable:$true] %s34
      %37 = dma.hbm_to_vmem [thread:$0]  %s33, 128, %s35, [#allocation7]
    $region9: #{tpu_custom_call.1} parent=1 // pred_fallthru
      _
    // Predicated region
    $region10: #{tpu_custom_call.1} parent=1 // pred_check
      _
    $region11: #{tpu_custom_call.1} parent=1 // pred_check_branch
      %39 = sbr.rel (0) target = $region13
    $region12: #{tpu_custom_call.1} parent=1 // pred_region
      %41 = vsyncadd [#allocation7], 0
      %s43 = sshll.u32 %s2, 4
      %s44 = int_to_ptr.hbm [resolvable:$true] %s43
      %s45 = sshll.u32 [#allocation8], 4
      %s46 = int_to_ptr.vmem [resolvable:$true] %s45
      %48 = dma.hbm_to_vmem [thread:$0]  %s44, 32, %s46, [#allocation7]
    $region13: #{tpu_custom_call.1} parent=1 // pred_fallthru
      _
    // Predicated region
    $region14: #{tpu_custom_call.1} parent=1 // pred_check
      _
    $region15: #{tpu_custom_call.1} parent=1 // pred_check_branch
      %50 = sbr.rel (0) target = $region17
    $region16: #{tpu_custom_call.1} parent=1 // pred_region
      %52 = vsyncadd [#allocation10], 0
      %s53 = sshll.u32 %s3, 4
      %s54 = int_to_ptr.hbm [resolvable:$true] %s53
      %s55 = sshll.u32 [#allocation9], 4
      %s56 = int_to_ptr.vmem [resolvable:$true] %s55
      %61 = dma.hbm_to_vmem [thread:$0]  %s54, 12288, %s56, [#allocation10], 1536, 1536, 96
    $region17: #{tpu_custom_call.1} parent=1 // pred_fallthru
      _
    // Predicated region
    $region18: #{tpu_custom_call.1} parent=1 // pred_check
      _
    $region19: #{tpu_custom_call.1} parent=1 // pred_check_branch
      %63 = sbr.rel (0) target = $region21
    $region20: #{tpu_custom_call.1} parent=1 // pred_region
      %65 = vsyncadd [#allocation10], 0
      %s66 = sshll.u32 %s4, 4
      %s67 = int_to_ptr.hbm [resolvable:$true] %s66
      %s68 = sshll.u32 [#allocation11], 4
      %s69 = int_to_ptr.vmem [resolvable:$true] %s68
      %74 = dma.hbm_to_vmem [thread:$0]  %s67, 384, %s69, [#allocation10], 128, 128, 8
    $region21: #{tpu_custom_call.1} parent=1 // pred_fallthru
      _
    // Predicated region
    $region22: #{tpu_custom_call.1} parent=1 // pred_check
      _
    $region23: #{tpu_custom_call.1} parent=1 // pred_check_branch
      %76 = sbr.rel (0) target = $region25
    $region24: #{tpu_custom_call.1} parent=1 // pred_region
      %78 = dma.done [#allocation4], 256
    $region25: #{tpu_custom_call.1} parent=1 // pred_fallthru
      _
    // Predicated region
    $region26: #{tpu_custom_call.1} parent=1 // pred_check
      _
    $region27: #{tpu_custom_call.1} parent=1 // pred_check_branch
      %80 = sbr.rel (0) target = $region29
    $region28: #{tpu_custom_call.1} parent=1 // pred_region
      %82 = dma.done [#allocation7], 128
    $region29: #{tpu_custom_call.1} parent=1 // pred_fallthru
      _
    // Predicated region
    $region30: #{tpu_custom_call.1} parent=1 // pred_check
      _
    $region31: #{tpu_custom_call.1} parent=1 // pred_check_branch
      %84 = sbr.rel (0) target = $region33
    $region32: #{tpu_custom_call.1} parent=1 // pred_region
      %86 = dma.done [#allocation7], 32
    $region33: #{tpu_custom_call.1} parent=1 // pred_fallthru
      _
    // Predicated region
    $region34: #{tpu_custom_call.1} parent=1 // pred_check
      _
    $region35: #{tpu_custom_call.1} parent=1 // pred_check_branch
      %88 = sbr.rel (0) target = $region37
    $region36: #{tpu_custom_call.1} parent=1 // pred_region
      %90 = dma.done [#allocation10], 12288
    $region37: #{tpu_custom_call.1} parent=1 // pred_fallthru
      _
    // Predicated region
    $region38: #{tpu_custom_call.1} parent=1 // pred_check
      _
    $region39: #{tpu_custom_call.1} parent=1 // pred_check_branch
      %92 = sbr.rel (0) target = $region41
    $region40: #{tpu_custom_call.1} parent=1 // pred_region
      %94 = dma.done [#allocation10], 384
    $region41: #{tpu_custom_call.1} parent=1 // pred_fallthru
      _
    %v95 = vld [vmem:[#allocation3] sm:$0xff]
    %v96 = vld [vmem:[#allocation3 + $0x8] sm:$0xff]
    %v97 = vld [vmem:[#allocation9] sm:$0xff]
    %v98 = vld [vmem:[#allocation9 + $0x60] sm:$0xff]
    %v99 = vld [vmem:[#allocation9 + $0xc0] sm:$0xff]
    %v100 = vld [vmem:[#allocation9 + $0x120] sm:$0xff]
    %v101 = vld [vmem:[#allocation9 + $0x180] sm:$0xff]
    %v102 = vld [vmem:[#allocation9 + $0x1e0] sm:$0xff]
    %v103 = vld [vmem:[#allocation9 + $0x240] sm:$0xff]
    %v104 = vld [vmem:[#allocation9 + $0x2a0] sm:$0xff]
    %v105 = vld [vmem:[#allocation11] sm:$0x1]
    %v106 = vperm.slane %v105, 0
    %vm107 = vcmask 523264
    %v109 = vsel %vm107, %v95, 0
    %v112 = vsel %vm107, %v96, 0
    %114 = vmatpush.msra.mxu0 0.0
    %115 = vmatpush.msra.mxu0 0.0
    %116 = vmatpush.msra.mxu0 0.0
    %117 = vmatpush.msra.mxu0 0.0
    %118 = vmatpush.msra.mxu0 0.0
    %119 = vmatpush.msra.mxu0 0.0
    %120 = vmatpush.msra.mxu0 0.0
    %121 = vmatpush.msra.mxu0 0.0
    %122 = vmatpush.msra.mxu0 %v104
    %123 = vmatpush.msra.mxu0 %v103
    %124 = vmatpush.msra.mxu0 %v102
    %125 = vmatpush.msra.mxu0 %v101
    %126 = vmatpush.msra.mxu0 %v100
    %127 = vmatpush.msra.mxu0 %v99
    %128 = vmatpush.msra.mxu0 %v98
    %129 = vmatpush.msra.mxu0 %v97
    %130 = vmatmul.f32.gmra.mxu0 %v109
    %v131 = vpop.f32.mrf.mxu0
    %v132 = vadd.f32 %v106, %v131
    %133 = vmatmul.f32.gmra.mxu0 %v112
    %v134 = vpop.f32.mrf.mxu0
    %v135 = vadd.f32 %v106, %v134
    %136 = vdwg.mxu0
    %v137 = vld [vmem:[#allocation11 + $0x1] sm:$0x1]
    %v138 = vld [vmem:[#allocation11 + $0x2] sm:$0x1]
    %vm139 = vcmask 261120
    %v140 = vsel %vm139, %v132, 0.0
    %141 = vadd.xlane.f32.xlu0 %v140
    %v142 = vpop.xlane.xlu0 %141
    %v143 = vsel %vm139, %v135, 0.0
    %144 = vadd.xlane.f32.xlu0 %v143
    %v145 = vpop.xlane.xlu0 %144
    %v146 = vrcp.pop 32.0
    %v147 = vmul.f32 32.0, %v146
    %v148 = vsub.f32 1.0, %v147
    %v149 = vmul.f32 %v146, %v148
    %v150 = vadd.f32 %v146, %v149
    %vm151 = vweird.f32 %v146
    %v152 = vsel %vm151, %v146, %v150
    %v153 = vmul.f32 %v142, %v152
    %v154 = vmul.f32 %v145, %v152
    %v155 = vsub.f32 %v132, %v153
    %v156 = vsub.f32 %v135, %v154
    %v157 = vmul.f32 %v155, %v155
    %v158 = vmul.f32 %v156, %v156
    %v159 = vsel %vm139, %v157, 0.0
    %160 = vadd.xlane.f32.xlu0 %v159
    %v161 = vpop.xlane.xlu0 %160
    %v162 = vsel %vm139, %v158, 0.0
    %163 = vadd.xlane.f32.xlu0 %v162
    %v164 = vpop.xlane.xlu0 %163
    %v165 = vmul.f32 %v161, %v152
    %v166 = vmul.f32 %v164, %v152
    %v167 = vadd.f32 %v165, 1e-05
    %v168 = vadd.f32 %v166, 1e-05
    %v169 = vrsqrt.pop %v167
    %v170 = vmul.f32 %v169, %v167
    %v171 = vmul.f32 %v170, %v169
    %v172 = vmul.f32 0.5, %v171
    %v173 = vsub.f32 1.5, %v172
    %v174 = vmul.f32 %v169, %v173
    %vm175 = vweird.f32 %v167
    %vm176 = vweird.f32 %v169
    %vm177 = vmor %vm175, %vm176
    %v178 = vsel %vm177, %v169, %v174
    %v179 = vrsqrt.pop %v168
    %v180 = vmul.f32 %v179, %v168
    %v181 = vmul.f32 %v180, %v179
    %v182 = vmul.f32 0.5, %v181
    %v183 = vsub.f32 1.5, %v182
    %v184 = vmul.f32 %v179, %v183
    %vm185 = vweird.f32 %v168
    %vm186 = vweird.f32 %v179
    %vm187 = vmor %vm185, %vm186
    %v188 = vsel %vm187, %v179, %v184
    %v189 = vmul.f32 %v155, %v178
    %v190 = vmul.f32 %v156, %v188
    %v191 = vperm.slane %v137, 0
    %v192 = vmul.f32 %v189, %v191
    %v193 = vmul.f32 %v190, %v191
    %v194 = vperm.slane %v138, 0
    %v195 = vadd.f32 %v192, %v194
    %v196 = vadd.f32 %v193, %v194
    %v197 = vmul.f32 %v195, 0.5
    %v198 = vmul.f32 %v196, 0.5
    %v199 = vmul.f32 %v195, 0.044715
    %v200 = vmul.f32 %v196, 0.044715
    %v201 = vmul.f32 %v199, %v195
    %v202 = vmul.f32 %v200, %v196
    %v203 = vmul.f32 %v201, %v195
    %v204 = vmul.f32 %v202, %v196
    %v205 = vadd.f32 %v195, %v203
    %v206 = vadd.f32 %v196, %v204
    %v207 = vmul.f32 %v205, 0.7978846
    %v208 = vmul.f32 %v206, 0.7978846
    %v209 = vtanh.pop %v207
    %v210 = vtanh.pop %v208
    %v211 = vadd.f32 %v209, 1.0
    %v212 = vadd.f32 %v210, 1.0
    %v213 = vmul.f32 %v197, %v211
    %v214 = vmul.f32 %v198, %v212
    %v215 = vld [vmem:[#allocation9 + $0x8] sm:$0xff]
    %v216 = vld [vmem:[#allocation9 + $0x68] sm:$0xff]
    %v217 = vld [vmem:[#allocation9 + $0xc8] sm:$0xff]
    %v218 = vld [vmem:[#allocation9 + $0x128] sm:$0xff]
    %v219 = vld [vmem:[#allocation11 + $0x3] sm:$0x1]
    %v220 = vperm.slane %v219, 0
    %v222 = vsel %vm139, %v213, 0
    %v225 = vsel %vm139, %v214, 0
    %227 = vmatpush.msra.mxu0 0.0
    %228 = vmatpush.msra.mxu0 0.0
    %229 = vmatpush.msra.mxu0 0.0
    %230 = vmatpush.msra.mxu0 0.0
    %231 = vmatpush.msra.mxu0 0.0
    %232 = vmatpush.msra.mxu0 0.0
    %233 = vmatpush.msra.mxu0 0.0
    %234 = vmatpush.msra.mxu0 0.0
    %235 = vmatpush.msra.mxu0 0.0
    %236 = vmatpush.msra.mxu0 0.0
    %237 = vmatpush.msra.mxu0 0.0
    %238 = vmatpush.msra.mxu0 0.0
    %239 = vmatpush.msra.mxu0 %v218
    %240 = vmatpush.msra.mxu0 %v217
    %241 = vmatpush.msra.mxu0 %v216
    %242 = vmatpush.msra.mxu0 %v215
    %243 = vmatmul.f32.gmra.mxu0 %v222
    %v244 = vpop.f32.mrf.mxu0
    %v245 = vadd.f32 %v220, %v244
    %246 = vmatmul.f32.gmra.mxu0 %v225
    %v247 = vpop.f32.mrf.mxu0
    %v248 = vadd.f32 %v220, %v247
    %249 = vdwg.mxu0
    %v250 = vld [vmem:[#allocation11 + $0x4] sm:$0x1]
    %v251 = vld [vmem:[#allocation11 + $0x5] sm:$0x1]
    %v252 = vsel %vm139, %v245, 0.0
    %253 = vadd.xlane.f32.xlu0 %v252
    %v254 = vpop.xlane.xlu0 %253
    %v255 = vsel %vm139, %v248, 0.0
    %256 = vadd.xlane.f32.xlu0 %v255
    %v257 = vpop.xlane.xlu0 %256
    %v258 = vmul.f32 %v254, %v152
    %v259 = vmul.f32 %v257, %v152
    %v260 = vsub.f32 %v245, %v258
    %v261 = vsub.f32 %v248, %v259
    %v262 = vmul.f32 %v260, %v260
    %v263 = vmul.f32 %v261, %v261
    %v264 = vsel %vm139, %v262, 0.0
    %265 = vadd.xlane.f32.xlu0 %v264
    %v266 = vpop.xlane.xlu0 %265
    %v267 = vsel %vm139, %v263, 0.0
    %268 = vadd.xlane.f32.xlu0 %v267
    %v269 = vpop.xlane.xlu0 %268
    %v270 = vmul.f32 %v266, %v152
    %v271 = vmul.f32 %v269, %v152
    %v272 = vadd.f32 %v270, 1e-05
    %v273 = vadd.f32 %v271, 1e-05
    %v274 = vrsqrt.pop %v272
    %v275 = vmul.f32 %v274, %v272
    %v276 = vmul.f32 %v275, %v274
    %v277 = vmul.f32 0.5, %v276
    %v278 = vsub.f32 1.5, %v277
    %v279 = vmul.f32 %v274, %v278
    %vm280 = vweird.f32 %v272
    %vm281 = vweird.f32 %v274
    %vm282 = vmor %vm280, %vm281
    %v283 = vsel %vm282, %v274, %v279
    %v284 = vrsqrt.pop %v273
    %v285 = vmul.f32 %v284, %v273
    %v286 = vmul.f32 %v285, %v284
    %v287 = vmul.f32 0.5, %v286
    %v288 = vsub.f32 1.5, %v287
    %v289 = vmul.f32 %v284, %v288
    %vm290 = vweird.f32 %v273
    %vm291 = vweird.f32 %v284
    %vm292 = vmor %vm290, %vm291
    %v293 = vsel %vm292, %v284, %v289
    %v294 = vmul.f32 %v260, %v283
    %v295 = vmul.f32 %v261, %v293
    %v296 = vperm.slane %v250, 0
    %v297 = vmul.f32 %v294, %v296
    %v298 = vmul.f32 %v295, %v296
    %v299 = vperm.slane %v251, 0
    %v300 = vadd.f32 %v297, %v299
    %v301 = vadd.f32 %v298, %v299
    %v302 = vmul.f32 %v300, 0.5
    %v303 = vmul.f32 %v301, 0.5
    %v304 = vmul.f32 %v300, 0.044715
    %v305 = vmul.f32 %v301, 0.044715
    %v306 = vmul.f32 %v304, %v300
    %v307 = vmul.f32 %v305, %v301
    %v308 = vmul.f32 %v306, %v300
    %v309 = vmul.f32 %v307, %v301
    %v310 = vadd.f32 %v300, %v308
    %v311 = vadd.f32 %v301, %v309
    %v312 = vmul.f32 %v310, 0.7978846
    %v313 = vmul.f32 %v311, 0.7978846
    %v314 = vtanh.pop %v312
    %v315 = vtanh.pop %v313
    %v316 = vadd.f32 %v314, 1.0
    %v317 = vadd.f32 %v315, 1.0
    %v318 = vmul.f32 %v302, %v316
    %v319 = vmul.f32 %v303, %v317
    %v320 = vld [vmem:[#allocation9 + $0x10] sm:$0xff]
    %v321 = vld [vmem:[#allocation9 + $0x70] sm:$0xff]
    %v322 = vld [vmem:[#allocation9 + $0xd0] sm:$0xff]
    %v323 = vld [vmem:[#allocation9 + $0x130] sm:$0xff]
    %v324 = vld [vmem:[#allocation9 + $0x18] sm:$0xff]
    %v325 = vld [vmem:[#allocation9 + $0x78] sm:$0xff]
    %v326 = vld [vmem:[#allocation9 + $0xd8] sm:$0xff]
    %v327 = vld [vmem:[#allocation9 + $0x138] sm:$0xff]
    %v329 = vsel %vm139, %v318, 0
    %v332 = vsel %vm139, %v319, 0
    %334 = vmatpush.msra.mxu0 0.0
    %335 = vmatpush.msra.mxu0 0.0
    %336 = vmatpush.msra.mxu0 0.0
    %337 = vmatpush.msra.mxu0 0.0
    %338 = vmatpush.msra.mxu0 0.0
    %339 = vmatpush.msra.mxu0 0.0
    %340 = vmatpush.msra.mxu0 0.0
    %341 = vmatpush.msra.mxu0 0.0
    %342 = vmatpush.msra.mxu0 0.0
    %343 = vmatpush.msra.mxu0 0.0
    %344 = vmatpush.msra.mxu0 0.0
    %345 = vmatpush.msra.mxu0 0.0
    %346 = vmatpush.msra.mxu0 %v327
    %347 = vmatpush.msra.mxu0 %v326
    %348 = vmatpush.msra.mxu0 %v325
    %349 = vmatpush.msra.mxu0 %v324
    %350 = vmatmul.f32.gmra.mxu0 %v329
    %v351 = vpop.f32.mrf.mxu0
    %v352 = vadd.f32 0.0, %v351
    %353 = vmatmul.f32.gmra.mxu0 %v332
    %v354 = vpop.f32.mrf.mxu0
    %v355 = vadd.f32 0.0, %v354
    %356 = vdwg.mxu0
    %357 = vmatpush.msra.mxu0 0.0
    %358 = vmatpush.msra.mxu0 0.0
    %359 = vmatpush.msra.mxu0 0.0
    %360 = vmatpush.msra.mxu0 0.0
    %361 = vmatpush.msra.mxu0 0.0
    %362 = vmatpush.msra.mxu0 0.0
    %363 = vmatpush.msra.mxu0 0.0
    %364 = vmatpush.msra.mxu0 0.0
    %365 = vmatpush.msra.mxu0 0.0
    %366 = vmatpush.msra.mxu0 0.0
    %367 = vmatpush.msra.mxu0 0.0
    %368 = vmatpush.msra.mxu0 0.0
    %369 = vmatpush.msra.mxu0 %v323
    %370 = vmatpush.msra.mxu0 %v322
    %371 = vmatpush.msra.mxu0 %v321
    %372 = vmatpush.msra.mxu0 %v320
    %373 = vmatmul.f32.gmra.mxu0 %v222
    %v374 = vpop.f32.mrf.mxu0
    %v375 = vadd.f32 %v352, %v374
    %376 = vmatmul.f32.gmra.mxu0 %v225
    %v377 = vpop.f32.mrf.mxu0
    %v378 = vadd.f32 %v355, %v377
    %379 = vdwg.mxu0
    %v380 = vld [vmem:[#allocation11 + $0x6] sm:$0x1]
    %v381 = vperm.slane %v380, 0
    %v382 = vadd.f32 %v375, %v381
    %v383 = vadd.f32 %v378, %v381
    %v384 = vld [vmem:[#allocation11 + $0x7] sm:$0x1]
    %v385 = vld [vmem:[#allocation11 + $0x8] sm:$0x1]
    %v386 = vsel %vm107, %v382, 0.0
    %387 = vadd.xlane.f32.xlu0 %v386
    %v388 = vpop.xlane.xlu0 %387
    %v389 = vsel %vm107, %v383, 0.0
    %390 = vadd.xlane.f32.xlu0 %v389
    %v391 = vpop.xlane.xlu0 %390
    %v392 = vrcp.pop 64.0
    %v393 = vmul.f32 64.0, %v392
    %v394 = vsub.f32 1.0, %v393
    %v395 = vmul.f32 %v392, %v394
    %v396 = vadd.f32 %v392, %v395
    %vm397 = vweird.f32 %v392
    %v398 = vsel %vm397, %v392, %v396
    %v399 = vmul.f32 %v388, %v398
    %v400 = vmul.f32 %v391, %v398
    %v401 = vsub.f32 %v382, %v399
    %v402 = vsub.f32 %v383, %v400
    %v403 = vmul.f32 %v401, %v401
    %v404 = vmul.f32 %v402, %v402
    %v405 = vsel %vm107, %v403, 0.0
    %406 = vadd.xlane.f32.xlu0 %v405
    %v407 = vpop.xlane.xlu0 %406
    %v408 = vsel %vm107, %v404, 0.0
    %409 = vadd.xlane.f32.xlu0 %v408
    %v410 = vpop.xlane.xlu0 %409
    %v411 = vmul.f32 %v407, %v398
    %v412 = vmul.f32 %v410, %v398
    %v413 = vadd.f32 %v411, 1e-05
    %v414 = vadd.f32 %v412, 1e-05
    %v415 = vrsqrt.pop %v413
    %v416 = vmul.f32 %v415, %v413
    %v417 = vmul.f32 %v416, %v415
    %v418 = vmul.f32 0.5, %v417
    %v419 = vsub.f32 1.5, %v418
    %v420 = vmul.f32 %v415, %v419
    %vm421 = vweird.f32 %v413
    %vm422 = vweird.f32 %v415
    %vm423 = vmor %vm421, %vm422
    %v424 = vsel %vm423, %v415, %v420
    %v425 = vrsqrt.pop %v414
    %v426 = vmul.f32 %v425, %v414
    %v427 = vmul.f32 %v426, %v425
    %v428 = vmul.f32 0.5, %v427
    %v429 = vsub.f32 1.5, %v428
    %v430 = vmul.f32 %v425, %v429
    %vm431 = vweird.f32 %v414
    %vm432 = vweird.f32 %v425
    %vm433 = vmor %vm431, %vm432
    %v434 = vsel %vm433, %v425, %v430
    %v435 = vmul.f32 %v401, %v424
    %v436 = vmul.f32 %v402, %v434
    %v437 = vperm.slane %v384, 0
    %v438 = vmul.f32 %v435, %v437
    %v439 = vmul.f32 %v436, %v437
    %v440 = vperm.slane %v385, 0
    %v441 = vadd.f32 %v438, %v440
    %v442 = vadd.f32 %v439, %v440
    %v443 = vmul.f32 %v441, 0.5
    %v444 = vmul.f32 %v442, 0.5
    %v445 = vmul.f32 %v441, 0.044715
    %v446 = vmul.f32 %v442, 0.044715
    %v447 = vmul.f32 %v445, %v441
    %v448 = vmul.f32 %v446, %v442
    %v449 = vmul.f32 %v447, %v441
    %v450 = vmul.f32 %v448, %v442
    %v451 = vadd.f32 %v441, %v449
    %v452 = vadd.f32 %v442, %v450
    %v453 = vmul.f32 %v451, 0.7978846
    %v454 = vmul.f32 %v452, 0.7978846
    %v455 = vtanh.pop %v453
    %v456 = vtanh.pop %v454
    %v457 = vadd.f32 %v455, 1.0
    %v458 = vadd.f32 %v456, 1.0
    %v459 = vmul.f32 %v443, %v457
    %v460 = vmul.f32 %v444, %v458
    %v461 = vld [vmem:[#allocation9 + $0x20] sm:$0xff]
    %v462 = vld [vmem:[#allocation9 + $0x80] sm:$0xff]
    %v463 = vld [vmem:[#allocation9 + $0xe0] sm:$0xff]
    %v464 = vld [vmem:[#allocation9 + $0x140] sm:$0xff]
    %v465 = vld [vmem:[#allocation9 + $0x28] sm:$0xff]
    %v466 = vld [vmem:[#allocation9 + $0x88] sm:$0xff]
    %v467 = vld [vmem:[#allocation9 + $0xe8] sm:$0xff]
    %v468 = vld [vmem:[#allocation9 + $0x148] sm:$0xff]
    %v469 = vld [vmem:[#allocation9 + $0x1a8] sm:$0xff]
    %v470 = vld [vmem:[#allocation9 + $0x208] sm:$0xff]
    %v471 = vld [vmem:[#allocation9 + $0x268] sm:$0xff]
    %v472 = vld [vmem:[#allocation9 + $0x2c8] sm:$0xff]
    %v474 = vsel %vm107, %v459, 0
    %v477 = vsel %vm107, %v460, 0
    %479 = vmatpush.msra.mxu0 0.0
    %480 = vmatpush.msra.mxu0 0.0
    %481 = vmatpush.msra.mxu0 0.0
    %482 = vmatpush.msra.mxu0 0.0
    %483 = vmatpush.msra.mxu0 0.0
    %484 = vmatpush.msra.mxu0 0.0
    %485 = vmatpush.msra.mxu0 0.0
    %486 = vmatpush.msra.mxu0 0.0
    %487 = vmatpush.msra.mxu0 %v472
    %488 = vmatpush.msra.mxu0 %v471
    %489 = vmatpush.msra.mxu0 %v470
    %490 = vmatpush.msra.mxu0 %v469
    %491 = vmatpush.msra.mxu0 %v468
    %492 = vmatpush.msra.mxu0 %v467
    %493 = vmatpush.msra.mxu0 %v466
    %494 = vmatpush.msra.mxu0 %v465
    %495 = vmatmul.f32.gmra.mxu0 %v474
    %v496 = vpop.f32.mrf.mxu0
    %v497 = vadd.f32 0.0, %v496
    %498 = vmatmul.f32.gmra.mxu0 %v477
    %v499 = vpop.f32.mrf.mxu0
    %v500 = vadd.f32 0.0, %v499
    %501 = vdwg.mxu0
    %502 = vmatpush.msra.mxu0 0.0
    %503 = vmatpush.msra.mxu0 0.0
    %504 = vmatpush.msra.mxu0 0.0
    %505 = vmatpush.msra.mxu0 0.0
    %506 = vmatpush.msra.mxu0 0.0
    %507 = vmatpush.msra.mxu0 0.0
    %508 = vmatpush.msra.mxu0 0.0
    %509 = vmatpush.msra.mxu0 0.0
    %510 = vmatpush.msra.mxu0 0.0
    %511 = vmatpush.msra.mxu0 0.0
    %512 = vmatpush.msra.mxu0 0.0
    %513 = vmatpush.msra.mxu0 0.0
    %514 = vmatpush.msra.mxu0 %v464
    %515 = vmatpush.msra.mxu0 %v463
    %516 = vmatpush.msra.mxu0 %v462
    %517 = vmatpush.msra.mxu0 %v461
    %518 = vmatmul.f32.gmra.mxu0 %v222
    %v519 = vpop.f32.mrf.mxu0
    %v520 = vadd.f32 %v497, %v519
    %521 = vmatmul.f32.gmra.mxu0 %v225
    %v522 = vpop.f32.mrf.mxu0
    %v523 = vadd.f32 %v500, %v522
    %524 = vdwg.mxu0
    %v525 = vld [vmem:[#allocation11 + $0x9] sm:$0x1]
    %v526 = vperm.slane %v525, 0
    %v527 = vadd.f32 %v520, %v526
    %v528 = vadd.f32 %v523, %v526
    %v529 = vld [vmem:[#allocation11 + $0xa] sm:$0x1]
    %v530 = vld [vmem:[#allocation11 + $0xb] sm:$0x1]
    %v531 = vsel %vm107, %v527, 0.0
    %532 = vadd.xlane.f32.xlu0 %v531
    %v533 = vpop.xlane.xlu0 %532
    %v534 = vsel %vm107, %v528, 0.0
    %535 = vadd.xlane.f32.xlu0 %v534
    %v536 = vpop.xlane.xlu0 %535
    %v537 = vmul.f32 %v533, %v398
    %v538 = vmul.f32 %v536, %v398
    %v539 = vsub.f32 %v527, %v537
    %v540 = vsub.f32 %v528, %v538
    %v541 = vmul.f32 %v539, %v539
    %v542 = vmul.f32 %v540, %v540
    %v543 = vsel %vm107, %v541, 0.0
    %544 = vadd.xlane.f32.xlu0 %v543
    %v545 = vpop.xlane.xlu0 %544
    %v546 = vsel %vm107, %v542, 0.0
    %547 = vadd.xlane.f32.xlu0 %v546
    %v548 = vpop.xlane.xlu0 %547
    %v549 = vmul.f32 %v545, %v398
    %v550 = vmul.f32 %v548, %v398
    %v551 = vadd.f32 %v549, 1e-05
    %v552 = vadd.f32 %v550, 1e-05
    %v553 = vrsqrt.pop %v551
    %v554 = vmul.f32 %v553, %v551
    %v555 = vmul.f32 %v554, %v553
    %v556 = vmul.f32 0.5, %v555
    %v557 = vsub.f32 1.5, %v556
    %v558 = vmul.f32 %v553, %v557
    %vm559 = vweird.f32 %v551
    %vm560 = vweird.f32 %v553
    %vm561 = vmor %vm559, %vm560
    %v562 = vsel %vm561, %v553, %v558
    %v563 = vrsqrt.pop %v552
    %v564 = vmul.f32 %v563, %v552
    %v565 = vmul.f32 %v564, %v563
    %v566 = vmul.f32 0.5, %v565
    %v567 = vsub.f32 1.5, %v566
    %v568 = vmul.f32 %v563, %v567
    %vm569 = vweird.f32 %v552
    %vm570 = vweird.f32 %v563
    %vm571 = vmor %vm569, %vm570
    %v572 = vsel %vm571, %v563, %v568
    %v573 = vmul.f32 %v539, %v562
    %v574 = vmul.f32 %v540, %v572
    %v575 = vperm.slane %v529, 0
    %v576 = vmul.f32 %v573, %v575
    %v577 = vmul.f32 %v574, %v575
    %v578 = vperm.slane %v530, 0
    %v579 = vadd.f32 %v576, %v578
    %v580 = vadd.f32 %v577, %v578
    %v581 = vmul.f32 %v579, 0.5
    %v582 = vmul.f32 %v580, 0.5
    %v583 = vmul.f32 %v579, 0.044715
    %v584 = vmul.f32 %v580, 0.044715
    %v585 = vmul.f32 %v583, %v579
    %v586 = vmul.f32 %v584, %v580
    %v587 = vmul.f32 %v585, %v579
    %v588 = vmul.f32 %v586, %v580
    %v589 = vadd.f32 %v579, %v587
    %v590 = vadd.f32 %v580, %v588
    %v591 = vmul.f32 %v589, 0.7978846
    %v592 = vmul.f32 %v590, 0.7978846
    %v593 = vtanh.pop %v591
    %v594 = vtanh.pop %v592
    %v595 = vadd.f32 %v593, 1.0
    %v596 = vadd.f32 %v594, 1.0
    %v597 = vmul.f32 %v581, %v595
    %v598 = vmul.f32 %v582, %v596
    %v599 = vld [vmem:[#allocation9 + $0x30] sm:$0xff]
    %v600 = vld [vmem:[#allocation9 + $0x90] sm:$0xff]
    %v601 = vld [vmem:[#allocation9 + $0xf0] sm:$0xff]
    %v602 = vld [vmem:[#allocation9 + $0x150] sm:$0xff]
    %v603 = vld [vmem:[#allocation9 + $0x38] sm:$0xff]
    %v604 = vld [vmem:[#allocation9 + $0x98] sm:$0xff]
    %v605 = vld [vmem:[#allocation9 + $0xf8] sm:$0xff]
    %v606 = vld [vmem:[#allocation9 + $0x158] sm:$0xff]
    %v607 = vld [vmem:[#allocation9 + $0x1b8] sm:$0xff]
    %v608 = vld [vmem:[#allocation9 + $0x218] sm:$0xff]
    %v609 = vld [vmem:[#allocation9 + $0x278] sm:$0xff]
    %v610 = vld [vmem:[#allocation9 + $0x2d8] sm:$0xff]
    %v612 = vsel %vm107, %v597, 0
    %v615 = vsel %vm107, %v598, 0
    %617 = vmatpush.msra.mxu0 0.0
    %618 = vmatpush.msra.mxu0 0.0
    %619 = vmatpush.msra.mxu0 0.0
    %620 = vmatpush.msra.mxu0 0.0
    %621 = vmatpush.msra.mxu0 0.0
    %622 = vmatpush.msra.mxu0 0.0
    %623 = vmatpush.msra.mxu0 0.0
    %624 = vmatpush.msra.mxu0 0.0
    %625 = vmatpush.msra.mxu0 %v610
    %626 = vmatpush.msra.mxu0 %v609
    %627 = vmatpush.msra.mxu0 %v608
    %628 = vmatpush.msra.mxu0 %v607
    %629 = vmatpush.msra.mxu0 %v606
    %630 = vmatpush.msra.mxu0 %v605
    %631 = vmatpush.msra.mxu0 %v604
    %632 = vmatpush.msra.mxu0 %v603
    %633 = vmatmul.f32.gmra.mxu0 %v612
    %v634 = vpop.f32.mrf.mxu0
    %v635 = vadd.f32 0.0, %v634
    %636 = vmatmul.f32.gmra.mxu0 %v615
    %v637 = vpop.f32.mrf.mxu0
    %v638 = vadd.f32 0.0, %v637
    %639 = vdwg.mxu0
    %640 = vmatpush.msra.mxu0 0.0
    %641 = vmatpush.msra.mxu0 0.0
    %642 = vmatpush.msra.mxu0 0.0
    %643 = vmatpush.msra.mxu0 0.0
    %644 = vmatpush.msra.mxu0 0.0
    %645 = vmatpush.msra.mxu0 0.0
    %646 = vmatpush.msra.mxu0 0.0
    %647 = vmatpush.msra.mxu0 0.0
    %648 = vmatpush.msra.mxu0 0.0
    %649 = vmatpush.msra.mxu0 0.0
    %650 = vmatpush.msra.mxu0 0.0
    %651 = vmatpush.msra.mxu0 0.0
    %652 = vmatpush.msra.mxu0 %v602
    %653 = vmatpush.msra.mxu0 %v601
    %654 = vmatpush.msra.mxu0 %v600
    %655 = vmatpush.msra.mxu0 %v599
    %656 = vmatmul.f32.gmra.mxu0 %v222
    %v657 = vpop.f32.mrf.mxu0
    %v658 = vadd.f32 %v635, %v657
    %659 = vmatmul.f32.gmra.mxu0 %v225
    %v660 = vpop.f32.mrf.mxu0
    %v661 = vadd.f32 %v638, %v660
    %662 = vdwg.mxu0
    %v663 = vld [vmem:[#allocation11 + $0xc] sm:$0x1]
    %v664 = vperm.slane %v663, 0
    %v665 = vadd.f32 %v658, %v664
    %v666 = vadd.f32 %v661, %v664
    %v667 = vld [vmem:[#allocation11 + $0xd] sm:$0x1]
    %v668 = vld [vmem:[#allocation11 + $0xe] sm:$0x1]
    %v669 = vsel %vm139, %v665, 0.0
    %670 = vadd.xlane.f32.xlu0 %v669
    %v671 = vpop.xlane.xlu0 %670
    %v672 = vsel %vm139, %v666, 0.0
    %673 = vadd.xlane.f32.xlu0 %v672
    %v674 = vpop.xlane.xlu0 %673
    %v675 = vmul.f32 %v671, %v152
    %v676 = vmul.f32 %v674, %v152
    %v677 = vsub.f32 %v665, %v675
    %v678 = vsub.f32 %v666, %v676
    %v679 = vmul.f32 %v677, %v677
    %v680 = vmul.f32 %v678, %v678
    %v681 = vsel %vm139, %v679, 0.0
    %682 = vadd.xlane.f32.xlu0 %v681
    %v683 = vpop.xlane.xlu0 %682
    %v684 = vsel %vm139, %v680, 0.0
    %685 = vadd.xlane.f32.xlu0 %v684
    %v686 = vpop.xlane.xlu0 %685
    %v687 = vmul.f32 %v683, %v152
    %v688 = vmul.f32 %v686, %v152
    %v689 = vadd.f32 %v687, 1e-05
    %v690 = vadd.f32 %v688, 1e-05
    %v691 = vrsqrt.pop %v689
    %v692 = vmul.f32 %v691, %v689
    %v693 = vmul.f32 %v692, %v691
    %v694 = vmul.f32 0.5, %v693
    %v695 = vsub.f32 1.5, %v694
    %v696 = vmul.f32 %v691, %v695
    %vm697 = vweird.f32 %v689
    %vm698 = vweird.f32 %v691
    %vm699 = vmor %vm697, %vm698
    %v700 = vsel %vm699, %v691, %v696
    %v701 = vrsqrt.pop %v690
    %v702 = vmul.f32 %v701, %v690
    %v703 = vmul.f32 %v702, %v701
    %v704 = vmul.f32 0.5, %v703
    %v705 = vsub.f32 1.5, %v704
    %v706 = vmul.f32 %v701, %v705
    %vm707 = vweird.f32 %v690
    %vm708 = vweird.f32 %v701
    %vm709 = vmor %vm707, %vm708
    %v710 = vsel %vm709, %v701, %v706
    %v711 = vmul.f32 %v677, %v700
    %v712 = vmul.f32 %v678, %v710
    %v713 = vperm.slane %v667, 0
    %v714 = vmul.f32 %v711, %v713
    %v715 = vmul.f32 %v712, %v713
    %v716 = vperm.slane %v668, 0
    %v717 = vadd.f32 %v714, %v716
    %v718 = vadd.f32 %v715, %v716
    %v719 = vmul.f32 %v717, 0.5
    %v720 = vmul.f32 %v718, 0.5
    %v721 = vmul.f32 %v717, 0.044715
    %v722 = vmul.f32 %v718, 0.044715
    %v723 = vmul.f32 %v721, %v717
    %v724 = vmul.f32 %v722, %v718
    %v725 = vmul.f32 %v723, %v717
    %v726 = vmul.f32 %v724, %v718
    %v727 = vadd.f32 %v717, %v725
    %v728 = vadd.f32 %v718, %v726
    %v729 = vmul.f32 %v727, 0.7978846
    %v730 = vmul.f32 %v728, 0.7978846
    %v731 = vtanh.pop %v729
    %v732 = vtanh.pop %v730
    %v733 = vadd.f32 %v731, 1.0
    %v734 = vadd.f32 %v732, 1.0
    %v735 = vmul.f32 %v719, %v733
    %v736 = vmul.f32 %v720, %v734
    %v737 = vld [vmem:[#allocation9 + $0x40] sm:$0xff]
    %v738 = vld [vmem:[#allocation9 + $0xa0] sm:$0xff]
    %v739 = vld [vmem:[#allocation9 + $0x100] sm:$0xff]
    %v740 = vld [vmem:[#allocation9 + $0x160] sm:$0xff]
    %v741 = vld [vmem:[#allocation11 + $0xf] sm:$0x1]
    %v742 = vperm.slane %v741, 0
    %v744 = vsel %vm139, %v735, 0
    %v747 = vsel %vm139, %v736, 0
    %749 = vmatpush.msra.mxu0 0.0
    %750 = vmatpush.msra.mxu0 0.0
    %751 = vmatpush.msra.mxu0 0.0
    %752 = vmatpush.msra.mxu0 0.0
    %753 = vmatpush.msra.mxu0 0.0
    %754 = vmatpush.msra.mxu0 0.0
    %755 = vmatpush.msra.mxu0 0.0
    %756 = vmatpush.msra.mxu0 0.0
    %757 = vmatpush.msra.mxu0 0.0
    %758 = vmatpush.msra.mxu0 0.0
    %759 = vmatpush.msra.mxu0 0.0
    %760 = vmatpush.msra.mxu0 0.0
    %761 = vmatpush.msra.mxu0 %v740
    %762 = vmatpush.msra.mxu0 %v739
    %763 = vmatpush.msra.mxu0 %v738
    %764 = vmatpush.msra.mxu0 %v737
    %765 = vmatmul.f32.gmra.mxu0 %v744
    %v766 = vpop.f32.mrf.mxu0
    %v767 = vadd.f32 %v742, %v766
    %768 = vmatmul.f32.gmra.mxu0 %v747
    %v769 = vpop.f32.mrf.mxu0
    %v770 = vadd.f32 %v742, %v769
    %771 = vdwg.mxu0
    %v772 = vld [vmem:[#allocation6] sm:$0xff]
    %v773 = vmul.f32 %v772, -1e+08
    %v774 = vld [vmem:[#allocation8] sm:$0x3]
    %v775 = vmul.f32 %v774, -1e+09
    %777 = vrot.lane.b32.xlu0 %v767, 96
    %v778 = vpop.permute.xlu0 %777
    %v779 = vsel %vm139, %v767, 0
    %v781 = vsel %vm139, %v778, 0
    %783 = vmatpush.xpose.msra.mxu0 0.0
    %784 = vmatpush.xpose.msra.mxu0 0.0
    %785 = vmatpush.xpose.msra.mxu0 0.0
    %786 = vmatpush.xpose.msra.mxu0 0.0
    %787 = vmatpush.xpose.msra.mxu0 0.0
    %788 = vmatpush.xpose.msra.mxu0 0.0
    %789 = vmatpush.xpose.msra.mxu0 0.0
    %790 = vmatpush.xpose.msra.mxu0 0.0
    %791 = vmatpush.xpose.msra.mxu0 0.0
    %792 = vmatpush.xpose.msra.mxu0 0.0
    %793 = vmatpush.xpose.msra.mxu0 0.0
    %794 = vmatpush.xpose.msra.mxu0 0.0
    %795 = vmatpush.xpose.msra.mxu0 0.0
    %796 = vmatpush.xpose.msra.mxu0 0.0
    %797 = vmatpush.xpose.msra.mxu0 0.0
    %798 = vmatpush.xpose.msra.mxu0 %v781
    %799 = vmatmul.f32.gmra.mxu0 %v779
    %v800 = vpop.f32.mrf.mxu0
    %v801 = vadd.f32 %v773, %v800
    %802 = vdwg.mxu0
    %v803 = vperm.slane %v775, 0
    %v804 = vadd.f32 %v801, %v803
    %vm805 = vcmask 64512
    %v806 = vsel %vm805, %v804, -inf
    %807 = vmax.xlane.f32.xlu0 %v806
    %v808 = vpop.xlane.xlu0 %807
    %v809 = vsub.f32 %v804, %v808
    %v810 = vmul.f32 %v809, 1.442695
    %v811 = vpow.pop %v810
    %v812 = vsel %vm805, %v811, 0.0
    %813 = vadd.xlane.f32.xlu0 %v812
    %v814 = vpop.xlane.xlu0 %813
    %v815 = vrcp.pop %v814
    %v816 = vmul.f32 %v811, %v815
    %817 = vrot.lane.b32.xlu0 %v767, 64
    %v818 = vpop.permute.xlu0 %817
    %v821 = vsel %vm805, %v816, 0
    %823 = vmatpush.msra.mxu0 0.0
    %824 = vmatpush.msra.mxu0 0.0
    %825 = vmatpush.msra.mxu0 0.0
    %826 = vmatpush.msra.mxu0 0.0
    %827 = vmatpush.msra.mxu0 0.0
    %828 = vmatpush.msra.mxu0 0.0
    %829 = vmatpush.msra.mxu0 0.0
    %830 = vmatpush.msra.mxu0 0.0
    %831 = vmatpush.msra.mxu0 0.0
    %832 = vmatpush.msra.mxu0 0.0
    %833 = vmatpush.msra.mxu0 0.0
    %834 = vmatpush.msra.mxu0 0.0
    %835 = vmatpush.msra.mxu0 0.0
    %836 = vmatpush.msra.mxu0 0.0
    %837 = vmatpush.msra.mxu0 0.0
    %838 = vmatpush.msra.mxu0 %v818
    %839 = vmatmul.f32.gmra.mxu0 %v821
    %v840 = vpop.f32.mrf.mxu0
    %v841 = vadd.f32 0.0, %v840
    %842 = vdwg.mxu0
    %843 = vst.msk [vmem:[#allocation2] sm:$0xff] %vm139, %v841
    %845 = vrot.lane.b32.xlu0 %v770, 96
    %v846 = vpop.permute.xlu0 %845
    %v847 = vsel %vm139, %v770, 0
    %v849 = vsel %vm139, %v846, 0
    %851 = vmatpush.xpose.msra.mxu0 0.0
    %852 = vmatpush.xpose.msra.mxu0 0.0
    %853 = vmatpush.xpose.msra.mxu0 0.0
    %854 = vmatpush.xpose.msra.mxu0 0.0
    %855 = vmatpush.xpose.msra.mxu0 0.0
    %856 = vmatpush.xpose.msra.mxu0 0.0
    %857 = vmatpush.xpose.msra.mxu0 0.0
    %858 = vmatpush.xpose.msra.mxu0 0.0
    %859 = vmatpush.xpose.msra.mxu0 0.0
    %860 = vmatpush.xpose.msra.mxu0 0.0
    %861 = vmatpush.xpose.msra.mxu0 0.0
    %862 = vmatpush.xpose.msra.mxu0 0.0
    %863 = vmatpush.xpose.msra.mxu0 0.0
    %864 = vmatpush.xpose.msra.mxu0 0.0
    %865 = vmatpush.xpose.msra.mxu0 0.0
    %866 = vmatpush.xpose.msra.mxu0 %v849
    %867 = vmatmul.f32.gmra.mxu0 %v847
    %v868 = vpop.f32.mrf.mxu0
    %v869 = vadd.f32 %v773, %v868
    %870 = vdwg.mxu0
    %v871 = vperm.slane %v775, 1
    %v872 = vadd.f32 %v869, %v871
    %v873 = vsel %vm805, %v872, -inf
    %874 = vmax.xlane.f32.xlu0 %v873
    %v875 = vpop.xlane.xlu0 %874
    %v876 = vsub.f32 %v872, %v875
    %v877 = vmul.f32 %v876, 1.442695
    %v878 = vpow.pop %v877
    %v879 = vsel %vm805, %v878, 0.0
    %880 = vadd.xlane.f32.xlu0 %v879
    %v881 = vpop.xlane.xlu0 %880
    %v882 = vrcp.pop %v881
    %v883 = vmul.f32 %v878, %v882
    %884 = vrot.lane.b32.xlu0 %v770, 64
    %v885 = vpop.permute.xlu0 %884
    %v888 = vsel %vm805, %v883, 0
    %890 = vmatpush.msra.mxu0 0.0
    %891 = vmatpush.msra.mxu0 0.0
    %892 = vmatpush.msra.mxu0 0.0
    %893 = vmatpush.msra.mxu0 0.0
    %894 = vmatpush.msra.mxu0 0.0
    %895 = vmatpush.msra.mxu0 0.0
    %896 = vmatpush.msra.mxu0 0.0
    %897 = vmatpush.msra.mxu0 0.0
    %898 = vmatpush.msra.mxu0 0.0
    %899 = vmatpush.msra.mxu0 0.0
    %900 = vmatpush.msra.mxu0 0.0
    %901 = vmatpush.msra.mxu0 0.0
    %902 = vmatpush.msra.mxu0 0.0
    %903 = vmatpush.msra.mxu0 0.0
    %904 = vmatpush.msra.mxu0 0.0
    %905 = vmatpush.msra.mxu0 %v885
    %906 = vmatmul.f32.gmra.mxu0 %v888
    %v907 = vpop.f32.mrf.mxu0
    %v908 = vadd.f32 0.0, %v907
    %909 = vdwg.mxu0
    %910 = vst.msk [vmem:[#allocation2 + $0x8] sm:$0xff] %vm139, %v908
    %v911 = vld [vmem:[#allocation2] sm:$0xff]
    %v912 = vld [vmem:[#allocation2 + $0x8] sm:$0xff]
    %v913 = vld [vmem:[#allocation9 + $0x48] sm:$0xff]
    %v914 = vld [vmem:[#allocation9 + $0xa8] sm:$0xff]
    %v915 = vld [vmem:[#allocation9 + $0x108] sm:$0xff]
    %v916 = vld [vmem:[#allocation9 + $0x168] sm:$0xff]
    %v917 = vld [vmem:[#allocation11 + $0x10] sm:$0x1]
    %v918 = vperm.slane %v917, 0
    %v920 = vsel %vm139, %v911, 0
    %v923 = vsel %vm139, %v912, 0
    %925 = vmatpush.msra.mxu0 0.0
    %926 = vmatpush.msra.mxu0 0.0
    %927 = vmatpush.msra.mxu0 0.0
    %928 = vmatpush.msra.mxu0 0.0
    %929 = vmatpush.msra.mxu0 0.0
    %930 = vmatpush.msra.mxu0 0.0
    %931 = vmatpush.msra.mxu0 0.0
    %932 = vmatpush.msra.mxu0 0.0
    %933 = vmatpush.msra.mxu0 0.0
    %934 = vmatpush.msra.mxu0 0.0
    %935 = vmatpush.msra.mxu0 0.0
    %936 = vmatpush.msra.mxu0 0.0
    %937 = vmatpush.msra.mxu0 %v916
    %938 = vmatpush.msra.mxu0 %v915
    %939 = vmatpush.msra.mxu0 %v914
    %940 = vmatpush.msra.mxu0 %v913
    %941 = vmatmul.f32.gmra.mxu0 %v920
    %v942 = vpop.f32.mrf.mxu0
    %v943 = vadd.f32 %v918, %v942
    %944 = vmatmul.f32.gmra.mxu0 %v923
    %v945 = vpop.f32.mrf.mxu0
    %v946 = vadd.f32 %v918, %v945
    %947 = vdwg.mxu0
    %v948 = vadd.f32 %v943, %v95
    %v949 = vadd.f32 %v946, %v96
    %v950 = vld [vmem:[#allocation11 + $0x11] sm:$0x1]
    %v951 = vld [vmem:[#allocation11 + $0x12] sm:$0x1]
    %v952 = vsel %vm107, %v948, 0.0
    %953 = vadd.xlane.f32.xlu0 %v952
    %v954 = vpop.xlane.xlu0 %953
    %v955 = vsel %vm107, %v949, 0.0
    %956 = vadd.xlane.f32.xlu0 %v955
    %v957 = vpop.xlane.xlu0 %956
    %v958 = vmul.f32 %v954, %v398
    %v959 = vmul.f32 %v957, %v398
    %v960 = vsub.f32 %v948, %v958
    %v961 = vsub.f32 %v949, %v959
    %v962 = vmul.f32 %v960, %v960
    %v963 = vmul.f32 %v961, %v961
    %v964 = vsel %vm107, %v962, 0.0
    %965 = vadd.xlane.f32.xlu0 %v964
    %v966 = vpop.xlane.xlu0 %965
    %v967 = vsel %vm107, %v963, 0.0
    %968 = vadd.xlane.f32.xlu0 %v967
    %v969 = vpop.xlane.xlu0 %968
    %v970 = vmul.f32 %v966, %v398
    %v971 = vmul.f32 %v969, %v398
    %v972 = vadd.f32 %v970, 1e-05
    %v973 = vadd.f32 %v971, 1e-05
    %v974 = vrsqrt.pop %v972
    %v975 = vmul.f32 %v974, %v972
    %v976 = vmul.f32 %v975, %v974
    %v977 = vmul.f32 0.5, %v976
    %v978 = vsub.f32 1.5, %v977
    %v979 = vmul.f32 %v974, %v978
    %vm980 = vweird.f32 %v972
    %vm981 = vweird.f32 %v974
    %vm982 = vmor %vm980, %vm981
    %v983 = vsel %vm982, %v974, %v979
    %v984 = vrsqrt.pop %v973
    %v985 = vmul.f32 %v984, %v973
    %v986 = vmul.f32 %v985, %v984
    %v987 = vmul.f32 0.5, %v986
    %v988 = vsub.f32 1.5, %v987
    %v989 = vmul.f32 %v984, %v988
    %vm990 = vweird.f32 %v973
    %vm991 = vweird.f32 %v984
    %vm992 = vmor %vm990, %vm991
    %v993 = vsel %vm992, %v984, %v989
    %v994 = vmul.f32 %v960, %v983
    %v995 = vmul.f32 %v961, %v993
    %v996 = vperm.slane %v950, 0
    %v997 = vmul.f32 %v994, %v996
    %v998 = vmul.f32 %v995, %v996
    %v999 = vperm.slane %v951, 0
    %v1000 = vadd.f32 %v997, %v999
    %v1001 = vadd.f32 %v998, %v999
    %v1002 = vld [vmem:[#allocation9 + $0x50] sm:$0xff]
    %v1003 = vld [vmem:[#allocation9 + $0xb0] sm:$0xff]
    %v1004 = vld [vmem:[#allocation9 + $0x110] sm:$0xff]
    %v1005 = vld [vmem:[#allocation9 + $0x170] sm:$0xff]
    %v1006 = vld [vmem:[#allocation9 + $0x1d0] sm:$0xff]
    %v1007 = vld [vmem:[#allocation9 + $0x230] sm:$0xff]
    %v1008 = vld [vmem:[#allocation9 + $0x290] sm:$0xff]
    %v1009 = vld [vmem:[#allocation9 + $0x2f0] sm:$0xff]
    %v1010 = vld [vmem:[#allocation11 + $0x13] sm:$0x1]
    %v1011 = vperm.slane %v1010, 0
    %v1013 = vsel %vm107, %v1000, 0
    %v1016 = vsel %vm107, %v1001, 0
    %1018 = vmatpush.msra.mxu0 0.0
    %1019 = vmatpush.msra.mxu0 0.0
    %1020 = vmatpush.msra.mxu0 0.0
    %1021 = vmatpush.msra.mxu0 0.0
    %1022 = vmatpush.msra.mxu0 0.0
    %1023 = vmatpush.msra.mxu0 0.0
    %1024 = vmatpush.msra.mxu0 0.0
    %1025 = vmatpush.msra.mxu0 0.0
    %1026 = vmatpush.msra.mxu0 %v1009
    %1027 = vmatpush.msra.mxu0 %v1008
    %1028 = vmatpush.msra.mxu0 %v1007
    %1029 = vmatpush.msra.mxu0 %v1006
    %1030 = vmatpush.msra.mxu0 %v1005
    %1031 = vmatpush.msra.mxu0 %v1004
    %1032 = vmatpush.msra.mxu0 %v1003
    %1033 = vmatpush.msra.mxu0 %v1002
    %1034 = vmatmul.f32.gmra.mxu0 %v1013
    %v1035 = vpop.f32.mrf.mxu0
    %v1036 = vadd.f32 %v1011, %v1035
    %1037 = vmatmul.f32.gmra.mxu0 %v1016
    %v1038 = vpop.f32.mrf.mxu0
    %v1039 = vadd.f32 %v1011, %v1038
    %1040 = vdwg.mxu0
    %v1041 = vmul.f32 %v1036, 0.5
    %v1042 = vmul.f32 %v1039, 0.5
    %v1043 = vmul.f32 %v1036, 0.044715
    %v1044 = vmul.f32 %v1039, 0.044715
    %v1045 = vmul.f32 %v1043, %v1036
    %v1046 = vmul.f32 %v1044, %v1039
    %v1047 = vmul.f32 %v1045, %v1036
    %v1048 = vmul.f32 %v1046, %v1039
    %v1049 = vadd.f32 %v1036, %v1047
    %v1050 = vadd.f32 %v1039, %v1048
    %v1051 = vmul.f32 %v1049, 0.7978846
    %v1052 = vmul.f32 %v1050, 0.7978846
    %v1053 = vtanh.pop %v1051
    %v1054 = vtanh.pop %v1052
    %v1055 = vadd.f32 %v1053, 1.0
    %v1056 = vadd.f32 %v1054, 1.0
    %v1057 = vmul.f32 %v1041, %v1055
    %v1058 = vmul.f32 %v1042, %v1056
    %v1059 = vld [vmem:[#allocation9 + $0x58] sm:$0xff]
    %v1060 = vld [vmem:[#allocation9 + $0xb8] sm:$0xff]
    %v1061 = vld [vmem:[#allocation11 + $0x14] sm:$0x1]
    %v1062 = vperm.slane %v1061, 0
    %vm1063 = vcmask 130048
    %v1065 = vsel %vm1063, %v1057, 0
    %v1068 = vsel %vm1063, %v1058, 0
    %1070 = vmatpush.msra.mxu0 0.0
    %1071 = vmatpush.msra.mxu0 0.0
    %1072 = vmatpush.msra.mxu0 0.0
    %1073 = vmatpush.msra.mxu0 0.0
    %1074 = vmatpush.msra.mxu0 0.0
    %1075 = vmatpush.msra.mxu0 0.0
    %1076 = vmatpush.msra.mxu0 0.0
    %1077 = vmatpush.msra.mxu0 0.0
    %1078 = vmatpush.msra.mxu0 0.0
    %1079 = vmatpush.msra.mxu0 0.0
    %1080 = vmatpush.msra.mxu0 0.0
    %1081 = vmatpush.msra.mxu0 0.0
    %1082 = vmatpush.msra.mxu0 0.0
    %1083 = vmatpush.msra.mxu0 0.0
    %1084 = vmatpush.msra.mxu0 %v1060
    %1085 = vmatpush.msra.mxu0 %v1059
    %1086 = vmatmul.f32.gmra.mxu0 %v1065
    %v1087 = vpop.f32.mrf.mxu0
    %v1088 = vadd.f32 %v1062, %v1087
    %1089 = vmatmul.f32.gmra.mxu0 %v1068
    %v1090 = vpop.f32.mrf.mxu0
    %v1091 = vadd.f32 %v1062, %v1090
    %1092 = vdwg.mxu0
    %v1093 = vadd.f32 %v1088, %v1000
    %v1094 = vadd.f32 %v1091, %v1001
    %v1095 = vld [vmem:[#allocation11 + $0x15] sm:$0x1]
    %v1096 = vld [vmem:[#allocation11 + $0x16] sm:$0x1]
    %v1097 = vsel %vm107, %v1093, 0.0
    %1098 = vadd.xlane.f32.xlu0 %v1097
    %v1099 = vpop.xlane.xlu0 %1098
    %v1100 = vsel %vm107, %v1094, 0.0
    %1101 = vadd.xlane.f32.xlu0 %v1100
    %v1102 = vpop.xlane.xlu0 %1101
    %v1103 = vmul.f32 %v1099, %v398
    %v1104 = vmul.f32 %v1102, %v398
    %v1105 = vsub.f32 %v1093, %v1103
    %v1106 = vsub.f32 %v1094, %v1104
    %v1107 = vmul.f32 %v1105, %v1105
    %v1108 = vmul.f32 %v1106, %v1106
    %v1109 = vsel %vm107, %v1107, 0.0
    %1110 = vadd.xlane.f32.xlu0 %v1109
    %v1111 = vpop.xlane.xlu0 %1110
    %v1112 = vsel %vm107, %v1108, 0.0
    %1113 = vadd.xlane.f32.xlu0 %v1112
    %v1114 = vpop.xlane.xlu0 %1113
    %v1115 = vmul.f32 %v1111, %v398
    %v1116 = vmul.f32 %v1114, %v398
    %v1117 = vadd.f32 %v1115, 1e-05
    %v1118 = vadd.f32 %v1116, 1e-05
    %v1119 = vrsqrt.pop %v1117
    %v1120 = vmul.f32 %v1119, %v1117
    %v1121 = vmul.f32 %v1120, %v1119
    %v1122 = vmul.f32 0.5, %v1121
    %v1123 = vsub.f32 1.5, %v1122
    %v1124 = vmul.f32 %v1119, %v1123
    %vm1125 = vweird.f32 %v1117
    %vm1126 = vweird.f32 %v1119
    %vm1127 = vmor %vm1125, %vm1126
    %v1128 = vsel %vm1127, %v1119, %v1124
    %v1129 = vrsqrt.pop %v1118
    %v1130 = vmul.f32 %v1129, %v1118
    %v1131 = vmul.f32 %v1130, %v1129
    %v1132 = vmul.f32 0.5, %v1131
    %v1133 = vsub.f32 1.5, %v1132
    %v1134 = vmul.f32 %v1129, %v1133
    %vm1135 = vweird.f32 %v1118
    %vm1136 = vweird.f32 %v1129
    %vm1137 = vmor %vm1135, %vm1136
    %v1138 = vsel %vm1137, %v1129, %v1134
    %v1139 = vmul.f32 %v1105, %v1128
    %v1140 = vmul.f32 %v1106, %v1138
    %v1141 = vperm.slane %v1095, 0
    %v1142 = vmul.f32 %v1139, %v1141
    %v1143 = vmul.f32 %v1140, %v1141
    %v1144 = vperm.slane %v1096, 0
    %v1145 = vadd.f32 %v1142, %v1144
    %v1146 = vadd.f32 %v1143, %v1144
    %1147 = vst.msk [vmem:[#allocation12] sm:$0xff] %vm107, %v1145
    %1148 = vst.msk [vmem:[#allocation12 + $0x8] sm:$0xff] %vm107, %v1146
    // Predicated region
    $region42: #{tpu_custom_call.1} parent=1 // pred_check
      _
    $region43: #{tpu_custom_call.1} parent=1 // pred_check_branch
      %1150 = sbr.rel (0) target = $region45
    $region44: #{tpu_custom_call.1} parent=1 // pred_region
      %1152 = vsyncadd [#allocation5], 0
      %s1153 = sshll.u32 [#allocation12], 4
      %s1154 = int_to_ptr.vmem [resolvable:$true] %s1153
      %s1155 = sshll.u32 %s5, 4
      %s1156 = int_to_ptr.hbm [resolvable:$true] %s1155
      %1161 = dma.vmem_to_hbm [thread:$0]  %s1154, 256, %s1156, [#allocation5], 128, 128, 8
    $region45: #{tpu_custom_call.1} parent=1 // pred_fallthru
      _
    // Predicated region
    $region46: #{tpu_custom_call.1} parent=1 // pred_check
      _
    $region47: #{tpu_custom_call.1} parent=1 // pred_check_branch
      %1163 = sbr.rel (0) target = $region49
    $region48: #{tpu_custom_call.1} parent=1 // pred_region
      %1165 = dma.done [#allocation5], 256
    $region49: #{tpu_custom_call.1} parent=1 // pred_fallthru
      _
    %1166 = vsyncpa [#allocation4], 1
    %1167 = vsyncpa [#allocation7], 1
    %1168 = vsyncpa [#allocation10], 1
    %1169 = vsyncpa [#allocation5], 1

</llo_original>
